<compile_context>
chip_gen: v7x
topology: tpu7x:2x2x1
jax: 0.10.0
libtpu: 0.0.40
codegen_flags: <defaults>
</compile_context>

<pallas_src>
import functools

import jax
import jax.numpy as jnp
import numpy as np
from jax.experimental import pallas as pl
from jax.experimental.pallas import tpu as pltpu


def _upscale_kernel(x_ref, w3_ref, w1_ref, b3_ref, b1_ref, o_ref, *,
                    TH, W, Cin, F, Co4):
    """One (row-strip, batch-element) tile per grid step.

    x_ref  : (1, TH+2, Cin, W+2)  zero-padded input strip (1-row/col halo),
                                  channels on sublanes, width on lanes
    w3_ref : (F, 9*Cin)           effective (weight-normalized) 3x3 weights,
                                  K ordered as (dy, dx, cin)
    w1_ref : (Co4, F)             effective 1x1 weights
    b3_ref : (TH, F, W)           untied-bias tile, conv_block
    b1_ref : (TH, Co4, W)         untied-bias tile, out_block
    o_ref  : (1, TH, Co4, W)      pre-pixel-shuffle output tile
    """
    w3 = w3_ref[...]                                   # (F, 9*Cin), hoisted
    w1 = w1_ref[...]                                   # (Co4, F)

    for h in range(TH):                                # static unroll over rows
        rows = [x_ref[0, h + dy] for dy in range(3)]   # each (Cin, W+2)
        taps = [rows[dy][:, dx:dx + W]                 # cheap lane slices
                for dy in range(3) for dx in range(3)]
        patch = jnp.concatenate(taps, axis=0)          # (9*Cin, W) im2col row

        # conv_block: fused im2col matmul (K = 9*Cin) + untied bias + LeakyReLU
        acc = jnp.dot(w3, patch, preferred_element_type=jnp.float32)   # (F, W)
        hb = acc + b3_ref[h].astype(jnp.float32)
        hb = jnp.where(hb >= 0, hb, 0.2 * hb)

        # out_block: 1x1 conv + untied bias; lane-dense (Co4, W) store
        y = jnp.dot(w1, hb.astype(w1.dtype), preferred_element_type=jnp.float32)
        o_ref[0, h] = (y + b1_ref[h].astype(jnp.float32)).astype(o_ref.dtype)


def _pick_row_tile(H, cap=32):
    # Largest divisor of H that is <= cap. cap=32 keeps double-buffered tiles
    # well under v7x's 64 MiB VMEM (v5e/v6e could take ~2x, but 32 is safe on
    # every generation and already amortizes the ~0.35us per-step overhead).
    for th in range(min(H, cap), 0, -1):
        if H % th == 0:
            return th
    return H


def upscale_net_forward(x_nchw, params, upscale_factor=2, tile_rows=None,
                        compute_dtype=jnp.float32):
    """PyTorch-equivalent forward. x_nchw: [N, Cin, H, W] -> [N, Cout, H*r, W*r].

    compute_dtype: dtype of the HBM-resident inputs/weights/biases seen by the
    kernel (matmuls always accumulate in f32). At production scale (1024^2) the
    op is HBM-bandwidth-bound, so bf16 here roughly halves traffic.
    """
    N, Cin, H, W = x_nchw.shape
    w3 = params["w3"]                                  # (F, Cin, 3, 3)  OIHW
    F_ = w3.shape[0]
    w1 = params["w1"]                                  # (Co4, F, 1, 1)
    Co4 = w1.shape[0]
    r = upscale_factor
    Cout = Co4 // (r * r)

    TH = tile_rows if tile_rows is not None else _pick_row_tile(H)
    assert H % TH == 0, (H, TH)
    nT = H // TH
    Wp = W + 2
    dt = jnp.dtype(compute_dtype)

    # ---- glue (plain JAX): batch-invariant parameter prep, hoisted out of the kernel ----
    # Weight norm: scalar norm over the whole tensor (ca_code Conv2dWNUB semantics).
    g3 = params["g3"].reshape(F_)
    g1 = params["g1"].reshape(Co4)
    w3_eff = w3 * (g3 / jnp.sqrt(jnp.sum(w3 ** 2)))[:, None, None, None]
    # (F, Cin, kh, kw) -> (F, kh, kw, Cin) -> (F, 9*Cin); K order = (dy, dx, cin)
    w3k = jnp.transpose(w3_eff, (0, 2, 3, 1)).reshape(F_, 9 * Cin).astype(dt)
    w1_eff = (w1.reshape(Co4, F_)
              * (g1 / jnp.sqrt(jnp.sum(w1 ** 2)))[:, None]).astype(dt)

    # Input: NCHW -> zero pad -> rows-outer / channels-on-sublane / width-on-lane,
    # then split into overlapping (TH+2)-row strips (halo rows duplicated; the
    # input is by far the smallest tensor, so this is cheap).
    xpad = jnp.pad(x_nchw, ((0, 0), (0, 0), (1, 1), (1, 1)))
    xr = jnp.transpose(xpad, (0, 2, 1, 3))                       # (N, H+2, Cin, Wp)
    row_idx = jnp.arange(nT)[:, None] * TH + jnp.arange(TH + 2)[None, :]
    x_strips = xr[:, row_idx].reshape(N * nT, TH + 2, Cin, Wp).astype(dt)

    # Untied biases: rows leading (tiled), channels on sublanes, width on lanes.
    b3 = jnp.transpose(params["b3"], (1, 0, 2)).astype(dt)       # (H, F, W)
    b1 = jnp.transpose(params["b1"], (1, 0, 2)).astype(dt)       # (H, Co4, W)

    kernel = functools.partial(_upscale_kernel, TH=TH, W=W, Cin=Cin, F=F_, Co4=Co4)

    itm = dt.itemsize
    flops = 2 * N * H * W * (9 * Cin * F_ + F_ * Co4)
    bytes_accessed = ((x_strips.size + w3k.size + w1_eff.size + b3.size + b1.size)
                      * itm + N * H * Co4 * W * 4)

    out = pl.pallas_call(
        kernel,
        out_shape=jax.ShapeDtypeStruct((N, H, Co4, W), jnp.float32),
        grid_spec=pltpu.PrefetchScalarGridSpec(
            num_scalar_prefetch=0,
            grid=(nT, N),      # batch innermost -> bias tiles fetched once per strip
            in_specs=[
                pl.BlockSpec((1, TH + 2, Cin, Wp),
                             lambda t, n: (n * nT + t, 0, 0, 0)),
                pl.BlockSpec((F_, 9 * Cin), lambda t, n: (0, 0)),
                pl.BlockSpec((Co4, F_), lambda t, n: (0, 0)),
                pl.BlockSpec((TH, F_, W), lambda t, n: (t, 0, 0)),
                pl.BlockSpec((TH, Co4, W), lambda t, n: (t, 0, 0)),
            ],
            out_specs=pl.BlockSpec((1, TH, Co4, W), lambda t, n: (n, t, 0, 0)),
        ),
        compiler_params=pltpu.CompilerParams(
            dimension_semantics=("parallel", "parallel"),   # megacore on v7x
            vmem_limit_bytes=32 * 1024 * 1024,              # safe scoped limit on all gens
        ),
        cost_estimate=pl.CostEstimate(flops=flops, transcendentals=0,
                                      bytes_accessed=bytes_accessed),
    )(x_strips, w3k, w1_eff, b3, b1)

    # PixelShuffle(r): out[n, h, c*r*r + i*r + j, w] -> y[n, c, h*r+i, w*r+j].
    # TODO(synk): fold this final (w, j) lane interleave into the kernel's output
    # layout to save one extra HBM read+write pass over the largest tensor.
    y = out.reshape(N, H, Cout, r, r, W)                 # (n, h, c, i, j, w)
    y = jnp.transpose(y, (0, 2, 1, 3, 5, 4))             # (n, c, h, i, w, j)
    return y.reshape(N, Cout, H * r, W * r)              # NCHW


def reference_forward(x, params, upscale_factor=2):
    """Pure-JAX (lax.conv) reference mirroring the PyTorch module, for validation."""
    def conv_wnub(x, w, g, b, padding):
        wnorm = jnp.sqrt(jnp.sum(w ** 2))
        w_eff = w * g[:, None, None, None] / wnorm
        y = jax.lax.conv_general_dilated(
            x, w_eff, window_strides=(1, 1),
            padding=[(padding, padding), (padding, padding)],
            dimension_numbers=("NCHW", "OIHW", "NCHW"))
        return y + b[None]

    h = conv_wnub(x, params["w3"], params["g3"], params["b3"], 1)
    h = jnp.where(h >= 0, h, 0.2 * h)
    y = conv_wnub(h, params["w1"], params["g1"], params["b1"], 0)
    N, C4, H, W = y.shape
    r = upscale_factor
    C = C4 // (r * r)
    y = y.reshape(N, C, r, r, H, W)
    y = jnp.transpose(y, (0, 1, 4, 2, 5, 3))
    return y.reshape(N, C, H * r, W * r)


if __name__ == "__main__":
    # Small shapes consistent with the module (size -> 16 instead of 1024).
    N, Cin, H, W = 2, 4, 16, 16
    n_ftrs, out_channels, r = 8, 3, 2
    Co4 = out_channels * r * r

    key = jax.random.PRNGKey(0)
    kx, k1, k2, k3, k4, k5, k6 = jax.random.split(key, 7)

    x = jax.random.normal(kx, (N, Cin, H, W), jnp.float32)
    params = {
        # conv_block Conv2dWNUB(in_channels, n_ftrs, H, W, k=3, pad=1)
        "w3": jax.random.normal(k1, (n_ftrs, Cin, 3, 3), jnp.float32) * 0.2,
        "g3": jax.random.uniform(k2, (n_ftrs,), jnp.float32, 0.5, 1.5),
        "b3": jax.random.normal(k3, (n_ftrs, H, W), jnp.float32) * 0.1,
        # out_block Conv2dWNUB(n_ftrs, out_channels*r^2, H, W, k=1, pad=0)
        "w1": jax.random.normal(k4, (Co4, n_ftrs, 1, 1), jnp.float32) * 0.2,
        "g1": jax.random.uniform(k5, (Co4,), jnp.float32, 0.5, 1.5),
        "b1": jax.random.normal(k6, (Co4, H, W), jnp.float32) * 0.1,
    }

    # tile_rows=8 -> 2 row strips x 2 batch elements = 4 grid steps, which
    # exercises the halo handling and the cross-batch bias-tile reuse.
    out = upscale_net_forward(x, params, upscale_factor=r, tile_rows=8)
    out = jax.block_until_ready(out)
    assert out.shape == (N, out_channels, H * r, W * r), out.shape

    ref = jax.block_until_ready(reference_forward(x, params, upscale_factor=r))
    np.testing.assert_allclose(np.asarray(out), np.asarray(ref), rtol=1e-3, atol=1e-3)

    print("KERNEL_OK")
</pallas_src>

<mosaic_0001>
module attributes {stable_mosaic.version = 11 : i64} {
  func.func @_upscale_kernel(%arg0: i32, %arg1: i32, %arg2: memref<1x10x4x18xf32, #tpu.memory_space<vmem>>, %arg3: memref<8x36xf32, #tpu.memory_space<vmem>>, %arg4: memref<12x8xf32, #tpu.memory_space<vmem>>, %arg5: memref<8x8x16xf32, #tpu.memory_space<vmem>>, %arg6: memref<8x12x16xf32, #tpu.memory_space<vmem>>, %arg7: memref<1x8x12x16xf32, #tpu.memory_space<vmem>>) attributes {dimension_semantics = [#tpu.dimension_semantics<parallel>, #tpu.dimension_semantics<parallel>], iteration_bounds = array<i64: 2, 2>, scalar_prefetch = 0 : i64, scratch_operands = 0 : i64, tpu.core_type = #tpu.core_type<tc>, window_params = [{transform_indices = @transform_0, window_bounds = array<i64: 1, 10, 4, 18>}, {pipeline_mode = #tpu.pipeline_mode<synchronous>, transform_indices = @transform_1, window_bounds = array<i64: 8, 36>}, {pipeline_mode = #tpu.pipeline_mode<synchronous>, transform_indices = @transform_2, window_bounds = array<i64: 12, 8>}, {transform_indices = @transform_3, window_bounds = array<i64: 8, 8, 16>}, {transform_indices = @transform_4, window_bounds = array<i64: 8, 12, 16>}, {transform_indices = @transform_5, window_bounds = array<i64: 1, 8, 12, 16>}]} {
    %c0 = arith.constant 0 : index
    %c0_0 = arith.constant 0 : index
    %0 = vector.load %arg3[%c0, %c0_0] : memref<8x36xf32, #tpu.memory_space<vmem>>, vector<8x36xf32>
    %c0_1 = arith.constant 0 : index
    %c0_2 = arith.constant 0 : index
    %1 = vector.load %arg4[%c0_1, %c0_2] : memref<12x8xf32, #tpu.memory_space<vmem>>, vector<12x8xf32>
    %c0_3 = arith.constant 0 : index
    %c0_4 = arith.constant 0 : index
    %c0_5 = arith.constant 0 : index
    %c0_6 = arith.constant 0 : index
    %2 = vector.load %arg2[%c0_3, %c0_4, %c0_5, %c0_6] : memref<1x10x4x18xf32, #tpu.memory_space<vmem>>, vector<1x1x4x18xf32>
    %3 = vector.shape_cast %2 : vector<1x1x4x18xf32> to vector<4x18xf32>
    %c0_7 = arith.constant 0 : index
    %c1 = arith.constant 1 : index
    %c0_8 = arith.constant 0 : index
    %c0_9 = arith.constant 0 : index
    %4 = vector.load %arg2[%c0_7, %c1, %c0_8, %c0_9] : memref<1x10x4x18xf32, #tpu.memory_space<vmem>>, vector<1x1x4x18xf32>
    %5 = vector.shape_cast %4 : vector<1x1x4x18xf32> to vector<4x18xf32>
    %c0_10 = arith.constant 0 : index
    %c2 = arith.constant 2 : index
    %c0_11 = arith.constant 0 : index
    %c0_12 = arith.constant 0 : index
    %6 = vector.load %arg2[%c0_10, %c2, %c0_11, %c0_12] : memref<1x10x4x18xf32, #tpu.memory_space<vmem>>, vector<1x1x4x18xf32>
    %7 = vector.shape_cast %6 : vector<1x1x4x18xf32> to vector<4x18xf32>
    %8 = vector.extract_strided_slice %3 {offsets = [0, 0], sizes = [4, 16], strides = [1, 1]} : vector<4x18xf32> to vector<4x16xf32>
    %9 = vector.extract_strided_slice %3 {offsets = [0, 1], sizes = [4, 16], strides = [1, 1]} : vector<4x18xf32> to vector<4x16xf32>
    %10 = vector.extract_strided_slice %3 {offsets = [0, 2], sizes = [4, 16], strides = [1, 1]} : vector<4x18xf32> to vector<4x16xf32>
    %11 = vector.extract_strided_slice %5 {offsets = [0, 0], sizes = [4, 16], strides = [1, 1]} : vector<4x18xf32> to vector<4x16xf32>
    %12 = vector.extract_strided_slice %5 {offsets = [0, 1], sizes = [4, 16], strides = [1, 1]} : vector<4x18xf32> to vector<4x16xf32>
    %13 = vector.extract_strided_slice %5 {offsets = [0, 2], sizes = [4, 16], strides = [1, 1]} : vector<4x18xf32> to vector<4x16xf32>
    %14 = vector.extract_strided_slice %7 {offsets = [0, 0], sizes = [4, 16], strides = [1, 1]} : vector<4x18xf32> to vector<4x16xf32>
    %15 = vector.extract_strided_slice %7 {offsets = [0, 1], sizes = [4, 16], strides = [1, 1]} : vector<4x18xf32> to vector<4x16xf32>
    %16 = vector.extract_strided_slice %7 {offsets = [0, 2], sizes = [4, 16], strides = [1, 1]} : vector<4x18xf32> to vector<4x16xf32>
    %17 = tpu.concatenate %8, %9, %10, %11, %12, %13, %14, %15, %16 in 0 : vector<4x16xf32>, vector<4x16xf32>, vector<4x16xf32>, vector<4x16xf32>, vector<4x16xf32>, vector<4x16xf32>, vector<4x16xf32>, vector<4x16xf32>, vector<4x16xf32> -> vector<36x16xf32>
    %cst = arith.constant dense<0.000000e+00> : vector<8x16xf32>
    %18 = tpu.matmul %0, %17, %cst {dimension_numbers = #tpu.dot_dimension_numbers<[1], [0], [0], [1], [0, 0, 1, 1], [], []>} : vector<8x36xf32>, vector<36x16xf32>, vector<8x16xf32> -> vector<8x16xf32>
    %c0_13 = arith.constant 0 : index
    %c0_14 = arith.constant 0 : index
    %c0_15 = arith.constant 0 : index
    %19 = vector.load %arg5[%c0_13, %c0_14, %c0_15] : memref<8x8x16xf32, #tpu.memory_space<vmem>>, vector<1x8x16xf32>
    %20 = vector.shape_cast %19 : vector<1x8x16xf32> to vector<8x16xf32>
    %21 = arith.addf %18, %20 : vector<8x16xf32>
    %cst_16 = arith.constant 0.000000e+00 : f32
    %22 = vector.broadcast %cst_16 : f32 to vector<8x16xf32>
    %23 = arith.cmpf oge, %21, %22 : vector<8x16xf32>
    %cst_17 = arith.constant 2.000000e-01 : f32
    %24 = vector.broadcast %cst_17 : f32 to vector<8x16xf32>
    %25 = arith.mulf %24, %21 : vector<8x16xf32>
    %26 = arith.select %23, %21, %25 : vector<8x16xi1>, vector<8x16xf32>
    %cst_18 = arith.constant dense<0.000000e+00> : vector<12x16xf32>
    %27 = tpu.matmul %1, %26, %cst_18 {dimension_numbers = #tpu.dot_dimension_numbers<[1], [0], [0], [1], [0, 0, 1, 1], [], []>} : vector<12x8xf32>, vector<8x16xf32>, vector<12x16xf32> -> vector<12x16xf32>
    %c0_19 = arith.constant 0 : index
    %c0_20 = arith.constant 0 : index
    %c0_21 = arith.constant 0 : index
    %28 = vector.load %arg6[%c0_19, %c0_20, %c0_21] : memref<8x12x16xf32, #tpu.memory_space<vmem>>, vector<1x12x16xf32>
    %29 = vector.shape_cast %28 : vector<1x12x16xf32> to vector<12x16xf32>
    %30 = arith.addf %27, %29 : vector<12x16xf32>
    %c0_22 = arith.constant 0 : index
    %c0_23 = arith.constant 0 : index
    %c0_24 = arith.constant 0 : index
    %c0_25 = arith.constant 0 : index
    %31 = vector.load %arg7[%c0_22, %c0_23, %c0_24, %c0_25] : memref<1x8x12x16xf32, #tpu.memory_space<vmem>>, vector<1x1x12x16xf32>
    %32 = vector.shape_cast %31 : vector<1x1x12x16xf32> to vector<12x16xf32>
    %33 = vector.shape_cast %30 : vector<12x16xf32> to vector<1x1x12x16xf32>
    tpu.vector_store %arg7[%c0_22, %c0_23, %c0_24, %c0_25], %33 {strides = array<i32>} : memref<1x8x12x16xf32, #tpu.memory_space<vmem>>, vector<1x1x12x16xf32>,
    %c0_26 = arith.constant 0 : index
    %c1_27 = arith.constant 1 : index
    %c0_28 = arith.constant 0 : index
    %c0_29 = arith.constant 0 : index
    %34 = vector.load %arg2[%c0_26, %c1_27, %c0_28, %c0_29] : memref<1x10x4x18xf32, #tpu.memory_space<vmem>>, vector<1x1x4x18xf32>
    %35 = vector.shape_cast %34 : vector<1x1x4x18xf32> to vector<4x18xf32>
    %c0_30 = arith.constant 0 : index
    %c2_31 = arith.constant 2 : index
    %c0_32 = arith.constant 0 : index
    %c0_33 = arith.constant 0 : index
    %36 = vector.load %arg2[%c0_30, %c2_31, %c0_32, %c0_33] : memref<1x10x4x18xf32, #tpu.memory_space<vmem>>, vector<1x1x4x18xf32>
    %37 = vector.shape_cast %36 : vector<1x1x4x18xf32> to vector<4x18xf32>
    %c0_34 = arith.constant 0 : index
    %c3 = arith.constant 3 : index
    %c0_35 = arith.constant 0 : index
    %c0_36 = arith.constant 0 : index
    %38 = vector.load %arg2[%c0_34, %c3, %c0_35, %c0_36] : memref<1x10x4x18xf32, #tpu.memory_space<vmem>>, vector<1x1x4x18xf32>
    %39 = vector.shape_cast %38 : vector<1x1x4x18xf32> to vector<4x18xf32>
    %40 = vector.extract_strided_slice %35 {offsets = [0, 0], sizes = [4, 16], strides = [1, 1]} : vector<4x18xf32> to vector<4x16xf32>
    %41 = vector.extract_strided_slice %35 {offsets = [0, 1], sizes = [4, 16], strides = [1, 1]} : vector<4x18xf32> to vector<4x16xf32>
    %42 = vector.extract_strided_slice %35 {offsets = [0, 2], sizes = [4, 16], strides = [1, 1]} : vector<4x18xf32> to vector<4x16xf32>
    %43 = vector.extract_strided_slice %37 {offsets = [0, 0], sizes = [4, 16], strides = [1, 1]} : vector<4x18xf32> to vector<4x16xf32>
    %44 = vector.extract_strided_slice %37 {offsets = [0, 1], sizes = [4, 16], strides = [1, 1]} : vector<4x18xf32> to vector<4x16xf32>
    %45 = vector.extract_strided_slice %37 {offsets = [0, 2], sizes = [4, 16], strides = [1, 1]} : vector<4x18xf32> to vector<4x16xf32>
    %46 = vector.extract_strided_slice %39 {offsets = [0, 0], sizes = [4, 16], strides = [1, 1]} : vector<4x18xf32> to vector<4x16xf32>
    %47 = vector.extract_strided_slice %39 {offsets = [0, 1], sizes = [4, 16], strides = [1, 1]} : vector<4x18xf32> to vector<4x16xf32>
    %48 = vector.extract_strided_slice %39 {offsets = [0, 2], sizes = [4, 16], strides = [1, 1]} : vector<4x18xf32> to vector<4x16xf32>
    %49 = tpu.concatenate %40, %41, %42, %43, %44, %45, %46, %47, %48 in 0 : vector<4x16xf32>, vector<4x16xf32>, vector<4x16xf32>, vector<4x16xf32>, vector<4x16xf32>, vector<4x16xf32>, vector<4x16xf32>, vector<4x16xf32>, vector<4x16xf32> -> vector<36x16xf32>
    %cst_37 = arith.constant dense<0.000000e+00> : vector<8x16xf32>
    %50 = tpu.matmul %0, %49, %cst_37 {dimension_numbers = #tpu.dot_dimension_numbers<[1], [0], [0], [1], [0, 0, 1, 1], [], []>} : vector<8x36xf32>, vector<36x16xf32>, vector<8x16xf32> -> vector<8x16xf32>
    %c1_38 = arith.constant 1 : index
    %c0_39 = arith.constant 0 : index
    %c0_40 = arith.constant 0 : index
    %51 = vector.load %arg5[%c1_38, %c0_39, %c0_40] : memref<8x8x16xf32, #tpu.memory_space<vmem>>, vector<1x8x16xf32>
    %52 = vector.shape_cast %51 : vector<1x8x16xf32> to vector<8x16xf32>
    %53 = arith.addf %50, %52 : vector<8x16xf32>
    %cst_41 = arith.constant 0.000000e+00 : f32
    %54 = vector.broadcast %cst_41 : f32 to vector<8x16xf32>
    %55 = arith.cmpf oge, %53, %54 : vector<8x16xf32>
    %cst_42 = arith.constant 2.000000e-01 : f32
    %56 = vector.broadcast %cst_42 : f32 to vector<8x16xf32>
    %57 = arith.mulf %56, %53 : vector<8x16xf32>
    %58 = arith.select %55, %53, %57 : vector<8x16xi1>, vector<8x16xf32>
    %cst_43 = arith.constant dense<0.000000e+00> : vector<12x16xf32>
    %59 = tpu.matmul %1, %58, %cst_43 {dimension_numbers = #tpu.dot_dimension_numbers<[1], [0], [0], [1], [0, 0, 1, 1], [], []>} : vector<12x8xf32>, vector<8x16xf32>, vector<12x16xf32> -> vector<12x16xf32>
    %c1_44 = arith.constant 1 : index
    %c0_45 = arith.constant 0 : index
    %c0_46 = arith.constant 0 : index
    %60 = vector.load %arg6[%c1_44, %c0_45, %c0_46] : memref<8x12x16xf32, #tpu.memory_space<vmem>>, vector<1x12x16xf32>
    %61 = vector.shape_cast %60 : vector<1x12x16xf32> to vector<12x16xf32>
    %62 = arith.addf %59, %61 : vector<12x16xf32>
    %c0_47 = arith.constant 0 : index
    %c1_48 = arith.constant 1 : index
    %c0_49 = arith.constant 0 : index
    %c0_50 = arith.constant 0 : index
    %63 = vector.load %arg7[%c0_47, %c1_48, %c0_49, %c0_50] : memref<1x8x12x16xf32, #tpu.memory_space<vmem>>, vector<1x1x12x16xf32>
    %64 = vector.shape_cast %63 : vector<1x1x12x16xf32> to vector<12x16xf32>
    %65 = vector.shape_cast %62 : vector<12x16xf32> to vector<1x1x12x16xf32>
    tpu.vector_store %arg7[%c0_47, %c1_48, %c0_49, %c0_50], %65 {strides = array<i32>} : memref<1x8x12x16xf32, #tpu.memory_space<vmem>>, vector<1x1x12x16xf32>,
    %c0_51 = arith.constant 0 : index
    %c2_52 = arith.constant 2 : index
    %c0_53 = arith.constant 0 : index
    %c0_54 = arith.constant 0 : index
    %66 = vector.load %arg2[%c0_51, %c2_52, %c0_53, %c0_54] : memref<1x10x4x18xf32, #tpu.memory_space<vmem>>, vector<1x1x4x18xf32>
    %67 = vector.shape_cast %66 : vector<1x1x4x18xf32> to vector<4x18xf32>
    %c0_55 = arith.constant 0 : index
    %c3_56 = arith.constant 3 : index
    %c0_57 = arith.constant 0 : index
    %c0_58 = arith.constant 0 : index
    %68 = vector.load %arg2[%c0_55, %c3_56, %c0_57, %c0_58] : memref<1x10x4x18xf32, #tpu.memory_space<vmem>>, vector<1x1x4x18xf32>
    %69 = vector.shape_cast %68 : vector<1x1x4x18xf32> to vector<4x18xf32>
    %c0_59 = arith.constant 0 : index
    %c4 = arith.constant 4 : index
    %c0_60 = arith.constant 0 : index
    %c0_61 = arith.constant 0 : index
    %70 = vector.load %arg2[%c0_59, %c4, %c0_60, %c0_61] : memref<1x10x4x18xf32, #tpu.memory_space<vmem>>, vector<1x1x4x18xf32>
    %71 = vector.shape_cast %70 : vector<1x1x4x18xf32> to vector<4x18xf32>
    %72 = vector.extract_strided_slice %67 {offsets = [0, 0], sizes = [4, 16], strides = [1, 1]} : vector<4x18xf32> to vector<4x16xf32>
    %73 = vector.extract_strided_slice %67 {offsets = [0, 1], sizes = [4, 16], strides = [1, 1]} : vector<4x18xf32> to vector<4x16xf32>
    %74 = vector.extract_strided_slice %67 {offsets = [0, 2], sizes = [4, 16], strides = [1, 1]} : vector<4x18xf32> to vector<4x16xf32>
    %75 = vector.extract_strided_slice %69 {offsets = [0, 0], sizes = [4, 16], strides = [1, 1]} : vector<4x18xf32> to vector<4x16xf32>
    %76 = vector.extract_strided_slice %69 {offsets = [0, 1], sizes = [4, 16], strides = [1, 1]} : vector<4x18xf32> to vector<4x16xf32>
    %77 = vector.extract_strided_slice %69 {offsets = [0, 2], sizes = [4, 16], strides = [1, 1]} : vector<4x18xf32> to vector<4x16xf32>
    %78 = vector.extract_strided_slice %71 {offsets = [0, 0], sizes = [4, 16], strides = [1, 1]} : vector<4x18xf32> to vector<4x16xf32>
    %79 = vector.extract_strided_slice %71 {offsets = [0, 1], sizes = [4, 16], strides = [1, 1]} : vector<4x18xf32> to vector<4x16xf32>
    %80 = vector.extract_strided_slice %71 {offsets = [0, 2], sizes = [4, 16], strides = [1, 1]} : vector<4x18xf32> to vector<4x16xf32>
    %81 = tpu.concatenate %72, %73, %74, %75, %76, %77, %78, %79, %80 in 0 : vector<4x16xf32>, vector<4x16xf32>, vector<4x16xf32>, vector<4x16xf32>, vector<4x16xf32>, vector<4x16xf32>, vector<4x16xf32>, vector<4x16xf32>, vector<4x16xf32> -> vector<36x16xf32>
    %cst_62 = arith.constant dense<0.000000e+00> : vector<8x16xf32>
    %82 = tpu.matmul %0, %81, %cst_62 {dimension_numbers = #tpu.dot_dimension_numbers<[1], [0], [0], [1], [0, 0, 1, 1], [], []>} : vector<8x36xf32>, vector<36x16xf32>, vector<8x16xf32> -> vector<8x16xf32>
    %c2_63 = arith.constant 2 : index
    %c0_64 = arith.constant 0 : index
    %c0_65 = arith.constant 0 : index
    %83 = vector.load %arg5[%c2_63, %c0_64, %c0_65] : memref<8x8x16xf32, #tpu.memory_space<vmem>>, vector<1x8x16xf32>
    %84 = vector.shape_cast %83 : vector<1x8x16xf32> to vector<8x16xf32>
    %85 = arith.addf %82, %84 : vector<8x16xf32>
    %cst_66 = arith.constant 0.000000e+00 : f32
    %86 = vector.broadcast %cst_66 : f32 to vector<8x16xf32>
    %87 = arith.cmpf oge, %85, %86 : vector<8x16xf32>
    %cst_67 = arith.constant 2.000000e-01 : f32
    %88 = vector.broadcast %cst_67 : f32 to vector<8x16xf32>
    %89 = arith.mulf %88, %85 : vector<8x16xf32>
    %90 = arith.select %87, %85, %89 : vector<8x16xi1>, vector<8x16xf32>
    %cst_68 = arith.constant dense<0.000000e+00> : vector<12x16xf32>
    %91 = tpu.matmul %1, %90, %cst_68 {dimension_numbers = #tpu.dot_dimension_numbers<[1], [0], [0], [1], [0, 0, 1, 1], [], []>} : vector<12x8xf32>, vector<8x16xf32>, vector<12x16xf32> -> vector<12x16xf32>
    %c2_69 = arith.constant 2 : index
    %c0_70 = arith.constant 0 : index
    %c0_71 = arith.constant 0 : index
    %92 = vector.load %arg6[%c2_69, %c0_70, %c0_71] : memref<8x12x16xf32, #tpu.memory_space<vmem>>, vector<1x12x16xf32>
    %93 = vector.shape_cast %92 : vector<1x12x16xf32> to vector<12x16xf32>
    %94 = arith.addf %91, %93 : vector<12x16xf32>
    %c0_72 = arith.constant 0 : index
    %c2_73 = arith.constant 2 : index
    %c0_74 = arith.constant 0 : index
    %c0_75 = arith.constant 0 : index
    %95 = vector.load %arg7[%c0_72, %c2_73, %c0_74, %c0_75] : memref<1x8x12x16xf32, #tpu.memory_space<vmem>>, vector<1x1x12x16xf32>
    %96 = vector.shape_cast %95 : vector<1x1x12x16xf32> to vector<12x16xf32>
    %97 = vector.shape_cast %94 : vector<12x16xf32> to vector<1x1x12x16xf32>
    tpu.vector_store %arg7[%c0_72, %c2_73, %c0_74, %c0_75], %97 {strides = array<i32>} : memref<1x8x12x16xf32, #tpu.memory_space<vmem>>, vector<1x1x12x16xf32>,
    %c0_76 = arith.constant 0 : index
    %c3_77 = arith.constant 3 : index
    %c0_78 = arith.constant 0 : index
    %c0_79 = arith.constant 0 : index
    %98 = vector.load %arg2[%c0_76, %c3_77, %c0_78, %c0_79] : memref<1x10x4x18xf32, #tpu.memory_space<vmem>>, vector<1x1x4x18xf32>
    %99 = vector.shape_cast %98 : vector<1x1x4x18xf32> to vector<4x18xf32>
    %c0_80 = arith.constant 0 : index
    %c4_81 = arith.constant 4 : index
    %c0_82 = arith.constant 0 : index
    %c0_83 = arith.constant 0 : index
    %100 = vector.load %arg2[%c0_80, %c4_81, %c0_82, %c0_83] : memref<1x10x4x18xf32, #tpu.memory_space<vmem>>, vector<1x1x4x18xf32>
    %101 = vector.shape_cast %100 : vector<1x1x4x18xf32> to vector<4x18xf32>
    %c0_84 = arith.constant 0 : index
    %c5 = arith.constant 5 : index
    %c0_85 = arith.constant 0 : index
    %c0_86 = arith.constant 0 : index
    %102 = vector.load %arg2[%c0_84, %c5, %c0_85, %c0_86] : memref<1x10x4x18xf32, #tpu.memory_space<vmem>>, vector<1x1x4x18xf32>
    %103 = vector.shape_cast %102 : vector<1x1x4x18xf32> to vector<4x18xf32>
    %104 = vector.extract_strided_slice %99 {offsets = [0, 0], sizes = [4, 16], strides = [1, 1]} : vector<4x18xf32> to vector<4x16xf32>
    %105 = vector.extract_strided_slice %99 {offsets = [0, 1], sizes = [4, 16], strides = [1, 1]} : vector<4x18xf32> to vector<4x16xf32>
    %106 = vector.extract_strided_slice %99 {offsets = [0, 2], sizes = [4, 16], strides = [1, 1]} : vector<4x18xf32> to vector<4x16xf32>
    %107 = vector.extract_strided_slice %101 {offsets = [0, 0], sizes = [4, 16], strides = [1, 1]} : vector<4x18xf32> to vector<4x16xf32>
    %108 = vector.extract_strided_slice %101 {offsets = [0, 1], sizes = [4, 16], strides = [1, 1]} : vector<4x18xf32> to vector<4x16xf32>
    %109 = vector.extract_strided_slice %101 {offsets = [0, 2], sizes = [4, 16], strides = [1, 1]} : vector<4x18xf32> to vector<4x16xf32>
    %110 = vector.extract_strided_slice %103 {offsets = [0, 0], sizes = [4, 16], strides = [1, 1]} : vector<4x18xf32> to vector<4x16xf32>
    %111 = vector.extract_strided_slice %103 {offsets = [0, 1], sizes = [4, 16], strides = [1, 1]} : vector<4x18xf32> to vector<4x16xf32>
    %112 = vector.extract_strided_slice %103 {offsets = [0, 2], sizes = [4, 16], strides = [1, 1]} : vector<4x18xf32> to vector<4x16xf32>
    %113 = tpu.concatenate %104, %105, %106, %107, %108, %109, %110, %111, %112 in 0 : vector<4x16xf32>, vector<4x16xf32>, vector<4x16xf32>, vector<4x16xf32>, vector<4x16xf32>, vector<4x16xf32>, vector<4x16xf32>, vector<4x16xf32>, vector<4x16xf32> -> vector<36x16xf32>
    %cst_87 = arith.constant dense<0.000000e+00> : vector<8x16xf32>
    %114 = tpu.matmul %0, %113, %cst_87 {dimension_numbers = #tpu.dot_dimension_numbers<[1], [0], [0], [1], [0, 0, 1, 1], [], []>} : vector<8x36xf32>, vector<36x16xf32>, vector<8x16xf32> -> vector<8x16xf32>
    %c3_88 = arith.constant 3 : index
    %c0_89 = arith.constant 0 : index
    %c0_90 = arith.constant 0 : index
    %115 = vector.load %arg5[%c3_88, %c0_89, %c0_90] : memref<8x8x16xf32, #tpu.memory_space<vmem>>, vector<1x8x16xf32>
    %116 = vector.shape_cast %115 : vector<1x8x16xf32> to vector<8x16xf32>
    %117 = arith.addf %114, %116 : vector<8x16xf32>
    %cst_91 = arith.constant 0.000000e+00 : f32
    %118 = vector.broadcast %cst_91 : f32 to vector<8x16xf32>
    %119 = arith.cmpf oge, %117, %118 : vector<8x16xf32>
    %cst_92 = arith.constant 2.000000e-01 : f32
    %120 = vector.broadcast %cst_92 : f32 to vector<8x16xf32>
    %121 = arith.mulf %120, %117 : vector<8x16xf32>
    %122 = arith.select %119, %117, %121 : vector<8x16xi1>, vector<8x16xf32>
    %cst_93 = arith.constant dense<0.000000e+00> : vector<12x16xf32>
    %123 = tpu.matmul %1, %122, %cst_93 {dimension_numbers = #tpu.dot_dimension_numbers<[1], [0], [0], [1], [0, 0, 1, 1], [], []>} : vector<12x8xf32>, vector<8x16xf32>, vector<12x16xf32> -> vector<12x16xf32>
    %c3_94 = arith.constant 3 : index
    %c0_95 = arith.constant 0 : index
    %c0_96 = arith.constant 0 : index
    %124 = vector.load %arg6[%c3_94, %c0_95, %c0_96] : memref<8x12x16xf32, #tpu.memory_space<vmem>>, vector<1x12x16xf32>
    %125 = vector.shape_cast %124 : vector<1x12x16xf32> to vector<12x16xf32>
    %126 = arith.addf %123, %125 : vector<12x16xf32>
    %c0_97 = arith.constant 0 : index
    %c3_98 = arith.constant 3 : index
    %c0_99 = arith.constant 0 : index
    %c0_100 = arith.constant 0 : index
    %127 = vector.load %arg7[%c0_97, %c3_98, %c0_99, %c0_100] : memref<1x8x12x16xf32, #tpu.memory_space<vmem>>, vector<1x1x12x16xf32>
    %128 = vector.shape_cast %127 : vector<1x1x12x16xf32> to vector<12x16xf32>
    %129 = vector.shape_cast %126 : vector<12x16xf32> to vector<1x1x12x16xf32>
    tpu.vector_store %arg7[%c0_97, %c3_98, %c0_99, %c0_100], %129 {strides = array<i32>} : memref<1x8x12x16xf32, #tpu.memory_space<vmem>>, vector<1x1x12x16xf32>,
    %c0_101 = arith.constant 0 : index
    %c4_102 = arith.constant 4 : index
    %c0_103 = arith.constant 0 : index
    %c0_104 = arith.constant 0 : index
    %130 = vector.load %arg2[%c0_101, %c4_102, %c0_103, %c0_104] : memref<1x10x4x18xf32, #tpu.memory_space<vmem>>, vector<1x1x4x18xf32>
    %131 = vector.shape_cast %130 : vector<1x1x4x18xf32> to vector<4x18xf32>
    %c0_105 = arith.constant 0 : index
    %c5_106 = arith.constant 5 : index
    %c0_107 = arith.constant 0 : index
    %c0_108 = arith.constant 0 : index
    %132 = vector.load %arg2[%c0_105, %c5_106, %c0_107, %c0_108] : memref<1x10x4x18xf32, #tpu.memory_space<vmem>>, vector<1x1x4x18xf32>
    %133 = vector.shape_cast %132 : vector<1x1x4x18xf32> to vector<4x18xf32>
    %c0_109 = arith.constant 0 : index
    %c6 = arith.constant 6 : index
    %c0_110 = arith.constant 0 : index
    %c0_111 = arith.constant 0 : index
    %134 = vector.load %arg2[%c0_109, %c6, %c0_110, %c0_111] : memref<1x10x4x18xf32, #tpu.memory_space<vmem>>, vector<1x1x4x18xf32>
    %135 = vector.shape_cast %134 : vector<1x1x4x18xf32> to vector<4x18xf32>
    %136 = vector.extract_strided_slice %131 {offsets = [0, 0], sizes = [4, 16], strides = [1, 1]} : vector<4x18xf32> to vector<4x16xf32>
    %137 = vector.extract_strided_slice %131 {offsets = [0, 1], sizes = [4, 16], strides = [1, 1]} : vector<4x18xf32> to vector<4x16xf32>
    %138 = vector.extract_strided_slice %131 {offsets = [0, 2], sizes = [4, 16], strides = [1, 1]} : vector<4x18xf32> to vector<4x16xf32>
    %139 = vector.extract_strided_slice %133 {offsets = [0, 0], sizes = [4, 16], strides = [1, 1]} : vector<4x18xf32> to vector<4x16xf32>
    %140 = vector.extract_strided_slice %133 {offsets = [0, 1], sizes = [4, 16], strides = [1, 1]} : vector<4x18xf32> to vector<4x16xf32>
    %141 = vector.extract_strided_slice %133 {offsets = [0, 2], sizes = [4, 16], strides = [1, 1]} : vector<4x18xf32> to vector<4x16xf32>
    %142 = vector.extract_strided_slice %135 {offsets = [0, 0], sizes = [4, 16], strides = [1, 1]} : vector<4x18xf32> to vector<4x16xf32>
    %143 = vector.extract_strided_slice %135 {offsets = [0, 1], sizes = [4, 16], strides = [1, 1]} : vector<4x18xf32> to vector<4x16xf32>
    %144 = vector.extract_strided_slice %135 {offsets = [0, 2], sizes = [4, 16], strides = [1, 1]} : vector<4x18xf32> to vector<4x16xf32>
    %145 = tpu.concatenate %136, %137, %138, %139, %140, %141, %142, %143, %144 in 0 : vector<4x16xf32>, vector<4x16xf32>, vector<4x16xf32>, vector<4x16xf32>, vector<4x16xf32>, vector<4x16xf32>, vector<4x16xf32>, vector<4x16xf32>, vector<4x16xf32> -> vector<36x16xf32>
    %cst_112 = arith.constant dense<0.000000e+00> : vector<8x16xf32>
    %146 = tpu.matmul %0, %145, %cst_112 {dimension_numbers = #tpu.dot_dimension_numbers<[1], [0], [0], [1], [0, 0, 1, 1], [], []>} : vector<8x36xf32>, vector<36x16xf32>, vector<8x16xf32> -> vector<8x16xf32>
    %c4_113 = arith.constant 4 : index
    %c0_114 = arith.constant 0 : index
    %c0_115 = arith.constant 0 : index
    %147 = vector.load %arg5[%c4_113, %c0_114, %c0_115] : memref<8x8x16xf32, #tpu.memory_space<vmem>>, vector<1x8x16xf32>
    %148 = vector.shape_cast %147 : vector<1x8x16xf32> to vector<8x16xf32>
    %149 = arith.addf %146, %148 : vector<8x16xf32>
    %cst_116 = arith.constant 0.000000e+00 : f32
    %150 = vector.broadcast %cst_116 : f32 to vector<8x16xf32>
    %151 = arith.cmpf oge, %149, %150 : vector<8x16xf32>
    %cst_117 = arith.constant 2.000000e-01 : f32
    %152 = vector.broadcast %cst_117 : f32 to vector<8x16xf32>
    %153 = arith.mulf %152, %149 : vector<8x16xf32>
    %154 = arith.select %151, %149, %153 : vector<8x16xi1>, vector<8x16xf32>
    %cst_118 = arith.constant dense<0.000000e+00> : vector<12x16xf32>
    %155 = tpu.matmul %1, %154, %cst_118 {dimension_numbers = #tpu.dot_dimension_numbers<[1], [0], [0], [1], [0, 0, 1, 1], [], []>} : vector<12x8xf32>, vector<8x16xf32>, vector<12x16xf32> -> vector<12x16xf32>
    %c4_119 = arith.constant 4 : index
    %c0_120 = arith.constant 0 : index
    %c0_121 = arith.constant 0 : index
    %156 = vector.load %arg6[%c4_119, %c0_120, %c0_121] : memref<8x12x16xf32, #tpu.memory_space<vmem>>, vector<1x12x16xf32>
    %157 = vector.shape_cast %156 : vector<1x12x16xf32> to vector<12x16xf32>
    %158 = arith.addf %155, %157 : vector<12x16xf32>
    %c0_122 = arith.constant 0 : index
    %c4_123 = arith.constant 4 : index
    %c0_124 = arith.constant 0 : index
    %c0_125 = arith.constant 0 : index
    %159 = vector.load %arg7[%c0_122, %c4_123, %c0_124, %c0_125] : memref<1x8x12x16xf32, #tpu.memory_space<vmem>>, vector<1x1x12x16xf32>
    %160 = vector.shape_cast %159 : vector<1x1x12x16xf32> to vector<12x16xf32>
    %161 = vector.shape_cast %158 : vector<12x16xf32> to vector<1x1x12x16xf32>
    tpu.vector_store %arg7[%c0_122, %c4_123, %c0_124, %c0_125], %161 {strides = array<i32>} : memref<1x8x12x16xf32, #tpu.memory_space<vmem>>, vector<1x1x12x16xf32>,
    %c0_126 = arith.constant 0 : index
    %c5_127 = arith.constant 5 : index
    %c0_128 = arith.constant 0 : index
    %c0_129 = arith.constant 0 : index
    %162 = vector.load %arg2[%c0_126, %c5_127, %c0_128, %c0_129] : memref<1x10x4x18xf32, #tpu.memory_space<vmem>>, vector<1x1x4x18xf32>
    %163 = vector.shape_cast %162 : vector<1x1x4x18xf32> to vector<4x18xf32>
    %c0_130 = arith.constant 0 : index
    %c6_131 = arith.constant 6 : index
    %c0_132 = arith.constant 0 : index
    %c0_133 = arith.constant 0 : index
    %164 = vector.load %arg2[%c0_130, %c6_131, %c0_132, %c0_133] : memref<1x10x4x18xf32, #tpu.memory_space<vmem>>, vector<1x1x4x18xf32>
    %165 = vector.shape_cast %164 : vector<1x1x4x18xf32> to vector<4x18xf32>
    %c0_134 = arith.constant 0 : index
    %c7 = arith.constant 7 : index
    %c0_135 = arith.constant 0 : index
    %c0_136 = arith.constant 0 : index
    %166 = vector.load %arg2[%c0_134, %c7, %c0_135, %c0_136] : memref<1x10x4x18xf32, #tpu.memory_space<vmem>>, vector<1x1x4x18xf32>
    %167 = vector.shape_cast %166 : vector<1x1x4x18xf32> to vector<4x18xf32>
    %168 = vector.extract_strided_slice %163 {offsets = [0, 0], sizes = [4, 16], strides = [1, 1]} : vector<4x18xf32> to vector<4x16xf32>
    %169 = vector.extract_strided_slice %163 {offsets = [0, 1], sizes = [4, 16], strides = [1, 1]} : vector<4x18xf32> to vector<4x16xf32>
    %170 = vector.extract_strided_slice %163 {offsets = [0, 2], sizes = [4, 16], strides = [1, 1]} : vector<4x18xf32> to vector<4x16xf32>
    %171 = vector.extract_strided_slice %165 {offsets = [0, 0], sizes = [4, 16], strides = [1, 1]} : vector<4x18xf32> to vector<4x16xf32>
    %172 = vector.extract_strided_slice %165 {offsets = [0, 1], sizes = [4, 16], strides = [1, 1]} : vector<4x18xf32> to vector<4x16xf32>
    %173 = vector.extract_strided_slice %165 {offsets = [0, 2], sizes = [4, 16], strides = [1, 1]} : vector<4x18xf32> to vector<4x16xf32>
    %174 = vector.extract_strided_slice %167 {offsets = [0, 0], sizes = [4, 16], strides = [1, 1]} : vector<4x18xf32> to vector<4x16xf32>
    %175 = vector.extract_strided_slice %167 {offsets = [0, 1], sizes = [4, 16], strides = [1, 1]} : vector<4x18xf32> to vector<4x16xf32>
    %176 = vector.extract_strided_slice %167 {offsets = [0, 2], sizes = [4, 16], strides = [1, 1]} : vector<4x18xf32> to vector<4x16xf32>
    %177 = tpu.concatenate %168, %169, %170, %171, %172, %173, %174, %175, %176 in 0 : vector<4x16xf32>, vector<4x16xf32>, vector<4x16xf32>, vector<4x16xf32>, vector<4x16xf32>, vector<4x16xf32>, vector<4x16xf32>, vector<4x16xf32>, vector<4x16xf32> -> vector<36x16xf32>
    %cst_137 = arith.constant dense<0.000000e+00> : vector<8x16xf32>
    %178 = tpu.matmul %0, %177, %cst_137 {dimension_numbers = #tpu.dot_dimension_numbers<[1], [0], [0], [1], [0, 0, 1, 1], [], []>} : vector<8x36xf32>, vector<36x16xf32>, vector<8x16xf32> -> vector<8x16xf32>
    %c5_138 = arith.constant 5 : index
    %c0_139 = arith.constant 0 : index
    %c0_140 = arith.constant 0 : index
    %179 = vector.load %arg5[%c5_138, %c0_139, %c0_140] : memref<8x8x16xf32, #tpu.memory_space<vmem>>, vector<1x8x16xf32>
    %180 = vector.shape_cast %179 : vector<1x8x16xf32> to vector<8x16xf32>
    %181 = arith.addf %178, %180 : vector<8x16xf32>
    %cst_141 = arith.constant 0.000000e+00 : f32
    %182 = vector.broadcast %cst_141 : f32 to vector<8x16xf32>
    %183 = arith.cmpf oge, %181, %182 : vector<8x16xf32>
    %cst_142 = arith.constant 2.000000e-01 : f32
    %184 = vector.broadcast %cst_142 : f32 to vector<8x16xf32>
    %185 = arith.mulf %184, %181 : vector<8x16xf32>
    %186 = arith.select %183, %181, %185 : vector<8x16xi1>, vector<8x16xf32>
    %cst_143 = arith.constant dense<0.000000e+00> : vector<12x16xf32>
    %187 = tpu.matmul %1, %186, %cst_143 {dimension_numbers = #tpu.dot_dimension_numbers<[1], [0], [0], [1], [0, 0, 1, 1], [], []>} : vector<12x8xf32>, vector<8x16xf32>, vector<12x16xf32> -> vector<12x16xf32>
    %c5_144 = arith.constant 5 : index
    %c0_145 = arith.constant 0 : index
    %c0_146 = arith.constant 0 : index
    %188 = vector.load %arg6[%c5_144, %c0_145, %c0_146] : memref<8x12x16xf32, #tpu.memory_space<vmem>>, vector<1x12x16xf32>
    %189 = vector.shape_cast %188 : vector<1x12x16xf32> to vector<12x16xf32>
    %190 = arith.addf %187, %189 : vector<12x16xf32>
    %c0_147 = arith.constant 0 : index
    %c5_148 = arith.constant 5 : index
    %c0_149 = arith.constant 0 : index
    %c0_150 = arith.constant 0 : index
    %191 = vector.load %arg7[%c0_147, %c5_148, %c0_149, %c0_150] : memref<1x8x12x16xf32, #tpu.memory_space<vmem>>, vector<1x1x12x16xf32>
    %192 = vector.shape_cast %191 : vector<1x1x12x16xf32> to vector<12x16xf32>
    %193 = vector.shape_cast %190 : vector<12x16xf32> to vector<1x1x12x16xf32>
    tpu.vector_store %arg7[%c0_147, %c5_148, %c0_149, %c0_150], %193 {strides = array<i32>} : memref<1x8x12x16xf32, #tpu.memory_space<vmem>>, vector<1x1x12x16xf32>,
    %c0_151 = arith.constant 0 : index
    %c6_152 = arith.constant 6 : index
    %c0_153 = arith.constant 0 : index
    %c0_154 = arith.constant 0 : index
    %194 = vector.load %arg2[%c0_151, %c6_152, %c0_153, %c0_154] : memref<1x10x4x18xf32, #tpu.memory_space<vmem>>, vector<1x1x4x18xf32>
    %195 = vector.shape_cast %194 : vector<1x1x4x18xf32> to vector<4x18xf32>
    %c0_155 = arith.constant 0 : index
    %c7_156 = arith.constant 7 : index
    %c0_157 = arith.constant 0 : index
    %c0_158 = arith.constant 0 : index
    %196 = vector.load %arg2[%c0_155, %c7_156, %c0_157, %c0_158] : memref<1x10x4x18xf32, #tpu.memory_space<vmem>>, vector<1x1x4x18xf32>
    %197 = vector.shape_cast %196 : vector<1x1x4x18xf32> to vector<4x18xf32>
    %c0_159 = arith.constant 0 : index
    %c8 = arith.constant 8 : index
    %c0_160 = arith.constant 0 : index
    %c0_161 = arith.constant 0 : index
    %198 = vector.load %arg2[%c0_159, %c8, %c0_160, %c0_161] : memref<1x10x4x18xf32, #tpu.memory_space<vmem>>, vector<1x1x4x18xf32>
    %199 = vector.shape_cast %198 : vector<1x1x4x18xf32> to vector<4x18xf32>
    %200 = vector.extract_strided_slice %195 {offsets = [0, 0], sizes = [4, 16], strides = [1, 1]} : vector<4x18xf32> to vector<4x16xf32>
    %201 = vector.extract_strided_slice %195 {offsets = [0, 1], sizes = [4, 16], strides = [1, 1]} : vector<4x18xf32> to vector<4x16xf32>
    %202 = vector.extract_strided_slice %195 {offsets = [0, 2], sizes = [4, 16], strides = [1, 1]} : vector<4x18xf32> to vector<4x16xf32>
    %203 = vector.extract_strided_slice %197 {offsets = [0, 0], sizes = [4, 16], strides = [1, 1]} : vector<4x18xf32> to vector<4x16xf32>
    %204 = vector.extract_strided_slice %197 {offsets = [0, 1], sizes = [4, 16], strides = [1, 1]} : vector<4x18xf32> to vector<4x16xf32>
    %205 = vector.extract_strided_slice %197 {offsets = [0, 2], sizes = [4, 16], strides = [1, 1]} : vector<4x18xf32> to vector<4x16xf32>
    %206 = vector.extract_strided_slice %199 {offsets = [0, 0], sizes = [4, 16], strides = [1, 1]} : vector<4x18xf32> to vector<4x16xf32>
    %207 = vector.extract_strided_slice %199 {offsets = [0, 1], sizes = [4, 16], strides = [1, 1]} : vector<4x18xf32> to vector<4x16xf32>
    %208 = vector.extract_strided_slice %199 {offsets = [0, 2], sizes = [4, 16], strides = [1, 1]} : vector<4x18xf32> to vector<4x16xf32>
    %209 = tpu.concatenate %200, %201, %202, %203, %204, %205, %206, %207, %208 in 0 : vector<4x16xf32>, vector<4x16xf32>, vector<4x16xf32>, vector<4x16xf32>, vector<4x16xf32>, vector<4x16xf32>, vector<4x16xf32>, vector<4x16xf32>, vector<4x16xf32> -> vector<36x16xf32>
    %cst_162 = arith.constant dense<0.000000e+00> : vector<8x16xf32>
    %210 = tpu.matmul %0, %209, %cst_162 {dimension_numbers = #tpu.dot_dimension_numbers<[1], [0], [0], [1], [0, 0, 1, 1], [], []>} : vector<8x36xf32>, vector<36x16xf32>, vector<8x16xf32> -> vector<8x16xf32>
    %c6_163 = arith.constant 6 : index
    %c0_164 = arith.constant 0 : index
    %c0_165 = arith.constant 0 : index
    %211 = vector.load %arg5[%c6_163, %c0_164, %c0_165] : memref<8x8x16xf32, #tpu.memory_space<vmem>>, vector<1x8x16xf32>
    %212 = vector.shape_cast %211 : vector<1x8x16xf32> to vector<8x16xf32>
    %213 = arith.addf %210, %212 : vector<8x16xf32>
    %cst_166 = arith.constant 0.000000e+00 : f32
    %214 = vector.broadcast %cst_166 : f32 to vector<8x16xf32>
    %215 = arith.cmpf oge, %213, %214 : vector<8x16xf32>
    %cst_167 = arith.constant 2.000000e-01 : f32
    %216 = vector.broadcast %cst_167 : f32 to vector<8x16xf32>
    %217 = arith.mulf %216, %213 : vector<8x16xf32>
    %218 = arith.select %215, %213, %217 : vector<8x16xi1>, vector<8x16xf32>
    %cst_168 = arith.constant dense<0.000000e+00> : vector<12x16xf32>
    %219 = tpu.matmul %1, %218, %cst_168 {dimension_numbers = #tpu.dot_dimension_numbers<[1], [0], [0], [1], [0, 0, 1, 1], [], []>} : vector<12x8xf32>, vector<8x16xf32>, vector<12x16xf32> -> vector<12x16xf32>
    %c6_169 = arith.constant 6 : index
    %c0_170 = arith.constant 0 : index
    %c0_171 = arith.constant 0 : index
    %220 = vector.load %arg6[%c6_169, %c0_170, %c0_171] : memref<8x12x16xf32, #tpu.memory_space<vmem>>, vector<1x12x16xf32>
    %221 = vector.shape_cast %220 : vector<1x12x16xf32> to vector<12x16xf32>
    %222 = arith.addf %219, %221 : vector<12x16xf32>
    %c0_172 = arith.constant 0 : index
    %c6_173 = arith.constant 6 : index
    %c0_174 = arith.constant 0 : index
    %c0_175 = arith.constant 0 : index
    %223 = vector.load %arg7[%c0_172, %c6_173, %c0_174, %c0_175] : memref<1x8x12x16xf32, #tpu.memory_space<vmem>>, vector<1x1x12x16xf32>
    %224 = vector.shape_cast %223 : vector<1x1x12x16xf32> to vector<12x16xf32>
    %225 = vector.shape_cast %222 : vector<12x16xf32> to vector<1x1x12x16xf32>
    tpu.vector_store %arg7[%c0_172, %c6_173, %c0_174, %c0_175], %225 {strides = array<i32>} : memref<1x8x12x16xf32, #tpu.memory_space<vmem>>, vector<1x1x12x16xf32>,
    %c0_176 = arith.constant 0 : index
    %c7_177 = arith.constant 7 : index
    %c0_178 = arith.constant 0 : index
    %c0_179 = arith.constant 0 : index
    %226 = vector.load %arg2[%c0_176, %c7_177, %c0_178, %c0_179] : memref<1x10x4x18xf32, #tpu.memory_space<vmem>>, vector<1x1x4x18xf32>
    %227 = vector.shape_cast %226 : vector<1x1x4x18xf32> to vector<4x18xf32>
    %c0_180 = arith.constant 0 : index
    %c8_181 = arith.constant 8 : index
    %c0_182 = arith.constant 0 : index
    %c0_183 = arith.constant 0 : index
    %228 = vector.load %arg2[%c0_180, %c8_181, %c0_182, %c0_183] : memref<1x10x4x18xf32, #tpu.memory_space<vmem>>, vector<1x1x4x18xf32>
    %229 = vector.shape_cast %228 : vector<1x1x4x18xf32> to vector<4x18xf32>
    %c0_184 = arith.constant 0 : index
    %c9 = arith.constant 9 : index
    %c0_185 = arith.constant 0 : index
    %c0_186 = arith.constant 0 : index
    %230 = vector.load %arg2[%c0_184, %c9, %c0_185, %c0_186] : memref<1x10x4x18xf32, #tpu.memory_space<vmem>>, vector<1x1x4x18xf32>
    %231 = vector.shape_cast %230 : vector<1x1x4x18xf32> to vector<4x18xf32>
    %232 = vector.extract_strided_slice %227 {offsets = [0, 0], sizes = [4, 16], strides = [1, 1]} : vector<4x18xf32> to vector<4x16xf32>
    %233 = vector.extract_strided_slice %227 {offsets = [0, 1], sizes = [4, 16], strides = [1, 1]} : vector<4x18xf32> to vector<4x16xf32>
    %234 = vector.extract_strided_slice %227 {offsets = [0, 2], sizes = [4, 16], strides = [1, 1]} : vector<4x18xf32> to vector<4x16xf32>
    %235 = vector.extract_strided_slice %229 {offsets = [0, 0], sizes = [4, 16], strides = [1, 1]} : vector<4x18xf32> to vector<4x16xf32>
    %236 = vector.extract_strided_slice %229 {offsets = [0, 1], sizes = [4, 16], strides = [1, 1]} : vector<4x18xf32> to vector<4x16xf32>
    %237 = vector.extract_strided_slice %229 {offsets = [0, 2], sizes = [4, 16], strides = [1, 1]} : vector<4x18xf32> to vector<4x16xf32>
    %238 = vector.extract_strided_slice %231 {offsets = [0, 0], sizes = [4, 16], strides = [1, 1]} : vector<4x18xf32> to vector<4x16xf32>
    %239 = vector.extract_strided_slice %231 {offsets = [0, 1], sizes = [4, 16], strides = [1, 1]} : vector<4x18xf32> to vector<4x16xf32>
    %240 = vector.extract_strided_slice %231 {offsets = [0, 2], sizes = [4, 16], strides = [1, 1]} : vector<4x18xf32> to vector<4x16xf32>
    %241 = tpu.concatenate %232, %233, %234, %235, %236, %237, %238, %239, %240 in 0 : vector<4x16xf32>, vector<4x16xf32>, vector<4x16xf32>, vector<4x16xf32>, vector<4x16xf32>, vector<4x16xf32>, vector<4x16xf32>, vector<4x16xf32>, vector<4x16xf32> -> vector<36x16xf32>
    %cst_187 = arith.constant dense<0.000000e+00> : vector<8x16xf32>
    %242 = tpu.matmul %0, %241, %cst_187 {dimension_numbers = #tpu.dot_dimension_numbers<[1], [0], [0], [1], [0, 0, 1, 1], [], []>} : vector<8x36xf32>, vector<36x16xf32>, vector<8x16xf32> -> vector<8x16xf32>
    %c7_188 = arith.constant 7 : index
    %c0_189 = arith.constant 0 : index
    %c0_190 = arith.constant 0 : index
    %243 = vector.load %arg5[%c7_188, %c0_189, %c0_190] : memref<8x8x16xf32, #tpu.memory_space<vmem>>, vector<1x8x16xf32>
    %244 = vector.shape_cast %243 : vector<1x8x16xf32> to vector<8x16xf32>
    %245 = arith.addf %242, %244 : vector<8x16xf32>
    %cst_191 = arith.constant 0.000000e+00 : f32
    %246 = vector.broadcast %cst_191 : f32 to vector<8x16xf32>
    %247 = arith.cmpf oge, %245, %246 : vector<8x16xf32>
    %cst_192 = arith.constant 2.000000e-01 : f32
    %248 = vector.broadcast %cst_192 : f32 to vector<8x16xf32>
    %249 = arith.mulf %248, %245 : vector<8x16xf32>
    %250 = arith.select %247, %245, %249 : vector<8x16xi1>, vector<8x16xf32>
    %cst_193 = arith.constant dense<0.000000e+00> : vector<12x16xf32>
    %251 = tpu.matmul %1, %250, %cst_193 {dimension_numbers = #tpu.dot_dimension_numbers<[1], [0], [0], [1], [0, 0, 1, 1], [], []>} : vector<12x8xf32>, vector<8x16xf32>, vector<12x16xf32> -> vector<12x16xf32>
    %c7_194 = arith.constant 7 : index
    %c0_195 = arith.constant 0 : index
    %c0_196 = arith.constant 0 : index
    %252 = vector.load %arg6[%c7_194, %c0_195, %c0_196] : memref<8x12x16xf32, #tpu.memory_space<vmem>>, vector<1x12x16xf32>
    %253 = vector.shape_cast %252 : vector<1x12x16xf32> to vector<12x16xf32>
    %254 = arith.addf %251, %253 : vector<12x16xf32>
    %c0_197 = arith.constant 0 : index
    %c7_198 = arith.constant 7 : index
    %c0_199 = arith.constant 0 : index
    %c0_200 = arith.constant 0 : index
    %255 = vector.load %arg7[%c0_197, %c7_198, %c0_199, %c0_200] : memref<1x8x12x16xf32, #tpu.memory_space<vmem>>, vector<1x1x12x16xf32>
    %256 = vector.shape_cast %255 : vector<1x1x12x16xf32> to vector<12x16xf32>
    %257 = vector.shape_cast %254 : vector<12x16xf32> to vector<1x1x12x16xf32>
    tpu.vector_store %arg7[%c0_197, %c7_198, %c0_199, %c0_200], %257 {strides = array<i32>} : memref<1x8x12x16xf32, #tpu.memory_space<vmem>>, vector<1x1x12x16xf32>,
    return
  }
  func.func @transform_0(%arg0: i32, %arg1: i32) -> (i32, i32, i32, i32) {
    %c2_i32 = arith.constant 2 : i32
    %0 = arith.muli %arg1, %c2_i32 : i32
    %1 = arith.addi %0, %arg0 : i32
    %c0_i32 = arith.constant 0 : i32
    %c0_i32_0 = arith.constant 0 : i32
    %c0_i32_1 = arith.constant 0 : i32
    %c0_i32_2 = arith.constant 0 : i32
    return %1, %c0_i32, %c0_i32_0, %c0_i32_1 : i32, i32, i32, i32
  }
  func.func @transform_1(%arg0: i32, %arg1: i32) -> (i32, i32) {
    %c0_i32 = arith.constant 0 : i32
    %c0_i32_0 = arith.constant 0 : i32
    %c0_i32_1 = arith.constant 0 : i32
    return %c0_i32, %c0_i32_0 : i32, i32
  }
  func.func @transform_2(%arg0: i32, %arg1: i32) -> (i32, i32) {
    %c0_i32 = arith.constant 0 : i32
    %c0_i32_0 = arith.constant 0 : i32
    %c0_i32_1 = arith.constant 0 : i32
    return %c0_i32, %c0_i32_0 : i32, i32
  }
  func.func @transform_3(%arg0: i32, %arg1: i32) -> (i32, i32, i32) {
    %c0_i32 = arith.constant 0 : i32
    %c0_i32_0 = arith.constant 0 : i32
    %c0_i32_1 = arith.constant 0 : i32
    return %arg0, %c0_i32, %c0_i32_0 : i32, i32, i32
  }
  func.func @transform_4(%arg0: i32, %arg1: i32) -> (i32, i32, i32) {
    %c0_i32 = arith.constant 0 : i32
    %c0_i32_0 = arith.constant 0 : i32
    %c0_i32_1 = arith.constant 0 : i32
    return %arg0, %c0_i32, %c0_i32_0 : i32, i32, i32
  }
  func.func @transform_5(%arg0: i32, %arg1: i32) -> (i32, i32, i32, i32) {
    %c0_i32 = arith.constant 0 : i32
    %c0_i32_0 = arith.constant 0 : i32
    %c0_i32_1 = arith.constant 0 : i32
    return %arg1, %arg0, %c0_i32, %c0_i32_0 : i32, i32, i32, i32
  }
}

</mosaic_0001>

<llo_original>
// kernel: tpu_custom_call.1
$region0: #{tpu_custom_call.1}
  #allocation0 [shape = 'u32[]', space=smem, size = 0x4, offset = 0x4, fixed_abs, tag = 'smem constant byte address 0x4 - core index']
  #allocation1 [shape = 'u32[144,128]{1,0:T(1,128)}', space=vmem, size = 0x12000, scoped, tag = 'internal scratch']
  %s0 = inlined_call_operand.vmem [shape: f32[4,10,4,18], index: 0, kind: input, shape index: {}]
  %s1 = inlined_call_operand.vmem [shape: f32[8,36], index: 1, kind: input, shape index: {}]
  %s2 = inlined_call_operand.vmem [shape: f32[12,8], index: 2, kind: input, shape index: {}]
  %s3 = inlined_call_operand.vmem [shape: f32[16,8,16], index: 3, kind: input, shape index: {}]
  %s4 = inlined_call_operand.vmem [shape: f32[16,12,16], index: 4, kind: input, shape index: {}]
  %s5 = inlined_call_operand.vmem [shape: f32[2,16,12,16], index: 5, kind: output, shape index: {}]
  %s6 = sld [smem:[#allocation0]]
  $region53: #{tpu_custom_call.1} parent=0
    _
  %s8 = ssub.s32 1, %s6
  %s9 = scalar_select 0, %s8, %s6
  loop: start=0, step=1, limit=6
  $region2: #{tpu_custom_call.1} parent=0 // loop_pre_header
    _
  $region3: #{tpu_custom_call.1} parent=0 // loop_header
    %s11 = sphi 0, %s15
    %p12 = scmp.ge.s32.totalorder %s11, 6
    %s18 = sphi 0, %s30
    %s19 = sphi 0, %s26
    %s20 = sphi 0, %s18
    %s21 = sphi 0, %s19
    %s22 = sphi 0, %s20
    %s23 = sphi 0, %s21
    %s37 = sphi 0, %s39
    %s40 = sphi 0, %s37
    %s41 = sphi 0, %s40
    %s57 = sphi 0, %s41
    %s61 = sphi 0, %s61
    %s63 = sphi 0, %s61
    %s64 = sphi 0, %s63
    %s78 = sphi 0, %s64
    %s82 = sphi 0, %s82
    %s84 = sphi 0, %s82
    %s85 = sphi 0, %s84
    %s99 = sphi 0, %s85
    %s105 = sphi 0, %s107
    %s108 = sphi 0, %s105
    %s109 = sphi 0, %s108
    %s125 = sphi 0, %s109
    %s131 = sphi 0, %s133
    %s134 = sphi 0, %s131
    %s135 = sphi 0, %s134
    %s151 = sphi 0, %s135
    %s159 = sphi 0, %s161
    %s162 = sphi 0, %s159
    %s163 = sphi 0, %s162
    %s179 = sphi 0, %s163
  $region4: #{tpu_custom_call.1} parent=0 // loop_header_branch
    %14 = sbr.rel (%p12) target = $region8
  $region5: #{tpu_custom_call.1} parent=0 // loop_body
    %s16 = ssub.s32 %s11, 1
    %s17 = ssub.s32 %s11, 2
    %s24 = sadd.s32 1, %s19
    %p25 = scmp.ge.s32.totalorder %s24, 2
    %s26 = scalar_select %p25, 0, %s24
    %s27 = sadd.s32 1, %s18
    %s28 = scalar_select %p25, %s27, %s18
    %p29 = scmp.ge.s32.totalorder %s28, 2
    %s30 = scalar_select %p29, 0, %s28
    %s31 = smul.u32 %s19, 2
    %s32 = sadd.s32 %s31, %s18
    %s33 = smul.u32 %s26, 2
    %s34 = sadd.s32 %s33, %s30
    %s35 = ssub.s32 %s32, %s34
    %p36 = scmp.eq.s32.totalorder %s35, 0
    %s38 = sadd.s32 %s37, 1
    %s39 = scalar_select %p36, %s37, %s38
    %p42 = pneg %p36
    %p43 = scmp.eq.s32.totalorder %s11, 3
    %p44 = por %p42, %p43
    %p45 = scmp.ne.s32.totalorder %s37, %s40
    %p46 = scmp.eq.s32.totalorder %s11, 0
    %p47 = por %p45, %p46
    %p48 = scmp.ne.s32.totalorder %s37, %s40
    %p49 = scmp.eq.s32.totalorder %s16, 3
    %p50 = por %p48, %p49
    %p51 = scmp.ne.s32.totalorder %s40, %s41
    %p52 = scmp.eq.s32.totalorder %s16, 0
    %p53 = por %p51, %p52
    %p54 = scmp.ne.s32.totalorder %s40, %s41
    %p55 = scmp.eq.s32.totalorder %s17, 3
    %p56 = por %p54, %p55
    %p58 = scmp.ne.s32.totalorder %s41, %s57
    %p59 = scmp.eq.s32.totalorder %s17, 0
    %p60 = por %p58, %p59
    %s62 = sadd.s32 %s61, 1
    %p65 = scmp.eq.s32.totalorder %s11, 3
    %p66 = scmp.ne.s32.totalorder %s61, %s63
    %p67 = scmp.eq.s32.totalorder %s11, 0
    %p68 = por %p66, %p67
    %p69 = scmp.ne.s32.totalorder %s61, %s63
    %p70 = scmp.eq.s32.totalorder %s16, 3
    %p71 = por %p69, %p70
    %p72 = scmp.ne.s32.totalorder %s63, %s64
    %p73 = scmp.eq.s32.totalorder %s16, 0
    %p74 = por %p72, %p73
    %p75 = scmp.ne.s32.totalorder %s63, %s64
    %p76 = scmp.eq.s32.totalorder %s17, 3
    %p77 = por %p75, %p76
    %p79 = scmp.ne.s32.totalorder %s64, %s78
    %p80 = scmp.eq.s32.totalorder %s17, 0
    %p81 = por %p79, %p80
    %s83 = sadd.s32 %s82, 1
    %p86 = scmp.eq.s32.totalorder %s11, 3
    %p87 = scmp.ne.s32.totalorder %s82, %s84
    %p88 = scmp.eq.s32.totalorder %s11, 0
    %p89 = por %p87, %p88
    %p90 = scmp.ne.s32.totalorder %s82, %s84
    %p91 = scmp.eq.s32.totalorder %s16, 3
    %p92 = por %p90, %p91
    %p93 = scmp.ne.s32.totalorder %s84, %s85
    %p94 = scmp.eq.s32.totalorder %s16, 0
    %p95 = por %p93, %p94
    %p96 = scmp.ne.s32.totalorder %s84, %s85
    %p97 = scmp.eq.s32.totalorder %s17, 3
    %p98 = por %p96, %p97
    %p100 = scmp.ne.s32.totalorder %s85, %s99
    %p101 = scmp.eq.s32.totalorder %s17, 0
    %p102 = por %p100, %p101
    %s103 = ssub.s32 %s18, %s30
    %p104 = scmp.eq.s32.totalorder %s103, 0
    %s106 = sadd.s32 %s105, 1
    %s107 = scalar_select %p104, %s105, %s106
    %p110 = pneg %p104
    %p111 = scmp.eq.s32.totalorder %s11, 3
    %p112 = por %p110, %p111
    %p113 = scmp.ne.s32.totalorder %s105, %s108
    %p114 = scmp.eq.s32.totalorder %s11, 0
    %p115 = por %p113, %p114
    %p116 = scmp.ne.s32.totalorder %s105, %s108
    %p117 = scmp.eq.s32.totalorder %s16, 3
    %p118 = por %p116, %p117
    %p119 = scmp.ne.s32.totalorder %s108, %s109
    %p120 = scmp.eq.s32.totalorder %s16, 0
    %p121 = por %p119, %p120
    %p122 = scmp.ne.s32.totalorder %s108, %s109
    %p123 = scmp.eq.s32.totalorder %s17, 3
    %p124 = por %p122, %p123
    %p126 = scmp.ne.s32.totalorder %s109, %s125
    %p127 = scmp.eq.s32.totalorder %s17, 0
    %p128 = por %p126, %p127
    %s129 = ssub.s32 %s18, %s30
    %p130 = scmp.eq.s32.totalorder %s129, 0
    %s132 = sadd.s32 %s131, 1
    %s133 = scalar_select %p130, %s131, %s132
    %p136 = pneg %p130
    %p137 = scmp.eq.s32.totalorder %s11, 3
    %p138 = por %p136, %p137
    %p139 = scmp.ne.s32.totalorder %s131, %s134
    %p140 = scmp.eq.s32.totalorder %s11, 0
    %p141 = por %p139, %p140
    %p142 = scmp.ne.s32.totalorder %s131, %s134
    %p143 = scmp.eq.s32.totalorder %s16, 3
    %p144 = por %p142, %p143
    %p145 = scmp.ne.s32.totalorder %s134, %s135
    %p146 = scmp.eq.s32.totalorder %s16, 0
    %p147 = por %p145, %p146
    %p148 = scmp.ne.s32.totalorder %s134, %s135
    %p149 = scmp.eq.s32.totalorder %s17, 3
    %p150 = por %p148, %p149
    %p152 = scmp.ne.s32.totalorder %s135, %s151
    %p153 = scmp.eq.s32.totalorder %s17, 0
    %p154 = por %p152, %p153
    %s155 = ssub.s32 %s19, %s26
    %s156 = ssub.s32 %s18, %s30
    %s157 = sor.u32 %s155, %s156
    %p158 = scmp.eq.s32.totalorder %s157, 0
    %s160 = sadd.s32 %s159, 1
    %s161 = scalar_select %p158, %s159, %s160
    %p164 = pneg %p158
    %p165 = scmp.eq.s32.totalorder %s11, 3
    %p166 = por %p164, %p165
    %p167 = scmp.ne.s32.totalorder %s159, %s162
    %p168 = scmp.eq.s32.totalorder %s11, 0
    %p169 = por %p167, %p168
    %p170 = scmp.ne.s32.totalorder %s159, %s162
    %p171 = scmp.eq.s32.totalorder %s16, 3
    %p172 = por %p170, %p171
    %p173 = scmp.ne.s32.totalorder %s162, %s163
    %p174 = scmp.eq.s32.totalorder %s16, 0
    %p175 = por %p173, %p174
    %p176 = scmp.ne.s32.totalorder %s162, %s163
    %p177 = scmp.eq.s32.totalorder %s17, 3
    %p178 = por %p176, %p177
    %p180 = scmp.ne.s32.totalorder %s163, %s179
    %p181 = scmp.eq.s32.totalorder %s17, 0
    %p182 = por %p180, %p181
    %p183 = scmp.le.s32.totalorder 1, %s11
    %p184 = scmp.lt.s32.totalorder %s11, 5
    %p185 = pnand %p183, %p184
    %p186 = pneg %p185
    // Predicated region
    $region9: #{tpu_custom_call.1} parent=5 // pred_check
      _
    $region10: #{tpu_custom_call.1} parent=5 // pred_check_branch
      %188 = sbr.rel (%p185) target = $region12
    $region11: #{tpu_custom_call.1} parent=5 // pred_region
      %s189 = ssub.s32 %s11, 1
      // Predicated region
      $region13: #{tpu_custom_call.1} parent=11 // pred_check
        %p190 = pneg %p74
      $region14: #{tpu_custom_call.1} parent=11 // pred_check_branch
        %192 = sbr.rel (%p190) target = $region16
      $region15: #{tpu_custom_call.1} parent=11 // pred_region
        _
      $region16: #{tpu_custom_call.1} parent=11 // pred_fallthru
        _
      // Predicated region
      $region17: #{tpu_custom_call.1} parent=11 // pred_check
        %p193 = pneg %p95
      $region18: #{tpu_custom_call.1} parent=11 // pred_check_branch
        %195 = sbr.rel (%p193) target = $region20
      $region19: #{tpu_custom_call.1} parent=11 // pred_region
        _
      $region20: #{tpu_custom_call.1} parent=11 // pred_fallthru
        _
    $region12: #{tpu_custom_call.1} parent=5 // pred_fallthru
      _
    %p196 = scmp.lt.s32.totalorder %s11, 4
    // Predicated region
    $region21: #{tpu_custom_call.1} parent=5 // pred_check
      %p197 = pneg %p196
    $region22: #{tpu_custom_call.1} parent=5 // pred_check_branch
      %199 = sbr.rel (%p197) target = $region24
    $region23: #{tpu_custom_call.1} parent=5 // pred_region
      // Predicated region
      $region25: #{tpu_custom_call.1} parent=23 // pred_check
        %p200 = pneg %p47
      $region26: #{tpu_custom_call.1} parent=23 // pred_check_branch
        %202 = sbr.rel (%p200) target = $region28
      $region27: #{tpu_custom_call.1} parent=23 // pred_region
        %s203 = smul.u32 %s19, 2
        %s204 = sadd.s32 %s203, %s18
        %p205 = scmp.lt.s32.totalorder %s204, 3
        %s206 = scalar_select %p205, %s204, 3
        %s207 = smul.addr %s206, 10
        %s208 = smul.addr %s207, 4
        %s209 = scalar_lea.vmem %s0, %s208
        %s210 = smul.u32 %s19, 2
        %s211 = sadd.s32 %s210, %s18
      $region28: #{tpu_custom_call.1} parent=23 // pred_fallthru
        _
      // Predicated region
      $region29: #{tpu_custom_call.1} parent=23 // pred_check
        %p212 = pneg %p115
      $region30: #{tpu_custom_call.1} parent=23 // pred_check_branch
        %214 = sbr.rel (%p212) target = $region32
      $region31: #{tpu_custom_call.1} parent=23 // pred_region
        %s215 = smul.u32 8, %s18
        %p216 = scmp.lt.s32.totalorder %s215, 15
        %s217 = scalar_select %p216, %s215, 15
        %s218 = smul.addr %s217, 8
        %s219 = scalar_lea.vmem %s3, %s218
        %s220 = smul.u32 8, %s18
      $region32: #{tpu_custom_call.1} parent=23 // pred_fallthru
        _
      // Predicated region
      $region33: #{tpu_custom_call.1} parent=23 // pred_check
        %p221 = pneg %p141
      $region34: #{tpu_custom_call.1} parent=23 // pred_check_branch
        %223 = sbr.rel (%p221) target = $region36
      $region35: #{tpu_custom_call.1} parent=23 // pred_region
        %s224 = smul.u32 8, %s18
        %p225 = scmp.lt.s32.totalorder %s224, 15
        %s226 = scalar_select %p225, %s224, 15
        %s227 = smul.addr %s226, 2
        %s228 = smul.addr %s227, 8
        %s229 = scalar_lea.vmem %s4, %s228
        %s230 = smul.u32 8, %s18
      $region36: #{tpu_custom_call.1} parent=23 // pred_fallthru
        _
    $region24: #{tpu_custom_call.1} parent=5 // pred_fallthru
      _
    %p231 = scmp.le.s32.totalorder 1, %s11
    %p232 = scmp.lt.s32.totalorder %s11, 5
    %p233 = pnand %p231, %p232
    %p234 = pneg %p233
    // Predicated region
    $region37: #{tpu_custom_call.1} parent=5 // pred_check
      _
    $region38: #{tpu_custom_call.1} parent=5 // pred_check_branch
      %236 = sbr.rel (%p233) target = $region40
    $region39: #{tpu_custom_call.1} parent=5 // pred_region
      %s237 = ssub.s32 %s11, 1
      %s238 = smul.u32 %s21, 2
      %s239 = sadd.s32 %s238, %s20
      %p240 = scmp.lt.s32.totalorder %s239, 3
      %s241 = scalar_select %p240, %s239, 3
      %s242 = smul.addr %s241, 10
      %s243 = smul.addr %s242, 4
      %s244 = scalar_lea.vmem %s0, %s243
      %p245 = pneg %p53
      %p246 = pneg %p50
      %p247 = pneg %p74
      %p248 = pneg %p71
      %p249 = pneg %p95
      %p250 = pneg %p92
      %s251 = smul.u32 8, %s20
      %p252 = scmp.lt.s32.totalorder %s251, 15
      %s253 = scalar_select %p252, %s251, 15
      %s254 = smul.addr %s253, 8
      %s255 = scalar_lea.vmem %s3, %s254
      %p256 = pneg %p121
      %p257 = pneg %p118
      %s258 = smul.u32 8, %s20
      %p259 = scmp.lt.s32.totalorder %s258, 15
      %s260 = scalar_select %p259, %s258, 15
      %s261 = smul.addr %s260, 2
      %s262 = smul.addr %s261, 8
      %s263 = scalar_lea.vmem %s4, %s262
      %p264 = pneg %p147
      %p265 = pneg %p144
      %p266 = pneg %p175
      %p267 = pneg %p172
      %s268 = smul.u32 8, %s20
      %p269 = scmp.lt.s32.totalorder %s21, 1
      %s270 = scalar_select %p269, %s21, 1
      %p271 = scmp.lt.s32.totalorder %s268, 15
      %s272 = scalar_select %p271, %s268, 15
      %s273 = smul.addr %s272, 2
      %s274 = smul.addr %s270, 32
      %s275 = sadd.s32 %s273, %s274
      %s276 = smul.addr %s275, 8
      %s277 = scalar_lea.vmem %s5, %s276
      %s278 = smul.u32 %s21, 2
      %s279 = sadd.s32 %s278, %s20
      %p280 = scmp.lt.s32.totalorder %s279, 3
      %s281 = scalar_select %p280, %s279, 3
      %s282 = smul.addr %s281, 10
      %s283 = smul.addr %s282, 4
      %s284 = scalar_lea.vmem %s0, %s283
      %s285 = smul.u32 %s21, 2
      %s286 = sadd.s32 %s285, %s20
      %s287 = smul.u32 8, %s20
      %p288 = scmp.lt.s32.totalorder %s287, 15
      %s289 = scalar_select %p288, %s287, 15
      %s290 = smul.addr %s289, 8
      %s291 = scalar_lea.vmem %s3, %s290
      %s292 = smul.u32 8, %s20
      %s293 = smul.u32 8, %s20
      %p294 = scmp.lt.s32.totalorder %s293, 15
      %s295 = scalar_select %p294, %s293, 15
      %s296 = smul.addr %s295, 2
      %s297 = smul.addr %s296, 8
      %s298 = scalar_lea.vmem %s4, %s297
      %s299 = smul.u32 8, %s20
      %s300 = smul.u32 8, %s20
      %p301 = scmp.lt.s32.totalorder %s21, 1
      %s302 = scalar_select %p301, %s21, 1
      %p303 = scmp.lt.s32.totalorder %s300, 15
      %s304 = scalar_select %p303, %s300, 15
      %s305 = smul.addr %s304, 2
      %s306 = smul.addr %s302, 32
      %s307 = sadd.s32 %s305, %s306
      %s308 = smul.addr %s307, 8
      %s309 = scalar_lea.vmem %s5, %s308
      %s310 = smul.u32 8, %s20
      %v311 = vld [vmem:[%s1] sm:$0xff]
      %v312 = vld [vmem:[%s2] sm:$0xff]
      %v313 = vld [vmem:[%s2 + $0x8] sm:$0xf]
      %v314 = vld [vmem:[%s284] sm:$0xf]
      %s315 = scalar_lea.vmem %s284, 4
      %v316 = vld [vmem:[%s315] sm:$0xf]
      %s317 = scalar_lea.vmem %s284, 8
      %v318 = vld [vmem:[%s317] sm:$0xf]
      %v320 = vrot.slane %v314, 4
      %321 = vrot.lane.b32.xlu0 %v320, 127
      %v322 = vpop.permute.xlu0 %321
      %324 = vrot.lane.b32.xlu0 %v314, 126
      %v325 = vpop.permute.xlu0 %324
      %v328 = vrot.slane %v316, 4
      %330 = vrot.lane.b32.xlu0 %v316, 127
      %v331 = vpop.permute.xlu0 %330
      %333 = vrot.lane.b32.xlu0 %v328, 126
      %v334 = vpop.permute.xlu0 %333
      %v337 = vrot.slane %v318, 4
      %338 = vrot.lane.b32.xlu0 %v337, 127
      %v339 = vpop.permute.xlu0 %338
      %341 = vrot.lane.b32.xlu0 %v318, 126
      %v342 = vpop.permute.xlu0 %341
      %vm343 = vcmask 1043456
      %v344 = vsel %vm343, %v314, %v322
      %v345 = vsel %vm343, %v325, %v328
      %v346 = vsel %vm343, %v331, %v334
      %v347 = vsel %vm343, %v318, %v339
      %v348 = vld [vmem:[%s291] sm:$0xff]
      %vm349 = vcmask 293888
      %v351 = vsel %vm349, %v311, 0
      %v353 = vsel %vm343, %v342, 0
      %355 = vmatprep.subr.mxu0 0.0
      %356 = vmatpush1.msra.mxu0 %v344
      %357 = vmatprep.subr.mxu0 0.0
      %358 = vmatpush1.msra.mxu0 %v345
      %359 = vmatprep.subr.mxu0 0.0
      %360 = vmatpush1.msra.mxu0 %v346
      %361 = vmatprep.subr.mxu0 0.0
      %362 = vmatpush1.msra.mxu0 %v347
      %363 = vmatprep.subr.mxu0 0.0
      %364 = vmatpush1.msra.mxu0 %v353
      %365 = vmatprep.subr.mxu0 0.0
      %366 = vmatpush1.msra.mxu0 0.0
      %367 = vmatprep.subr.mxu0 0.0
      %368 = vmatpush1.msra.mxu0 0.0
      %369 = vmatprep.subr.mxu0 0.0
      %370 = vmatpush1.msra.mxu0 0.0
      %371 = vmatprep.subr.mxu0 0.0
      %372 = vmatpush1.msra.mxu0 0.0
      %373 = vmatprep.subr.mxu0 0.0
      %374 = vmatpush1.msra.mxu0 0.0
      %375 = vmatprep.subr.mxu0 0.0
      %376 = vmatpush1.msra.mxu0 0.0
      %377 = vmatprep.subr.mxu0 0.0
      %378 = vmatpush1.msra.mxu0 0.0
      %379 = vmatprep.subr.mxu0 0.0
      %380 = vmatpush1.msra.mxu0 0.0
      %381 = vmatprep.subr.mxu0 0.0
      %382 = vmatpush1.msra.mxu0 0.0
      %383 = vmatprep.subr.mxu0 0.0
      %384 = vmatpush1.msra.mxu0 0.0
      %385 = vmatprep.subr.mxu0 0.0
      %386 = vmatpush1.msra.mxu0 0.0
      %387 = vmatprep.subr.mxu0 0.0
      %388 = vmatpush1.msra.mxu0 0.0
      %389 = vmatprep.subr.mxu0 0.0
      %390 = vmatpush1.msra.mxu0 0.0
      %391 = vmatprep.subr.mxu0 0.0
      %392 = vmatpush1.msra.mxu0 0.0
      %393 = vmatprep.subr.mxu0 0.0
      %394 = vmatpush1.msra.mxu0 0.0
      %395 = vmatprep.subr.mxu0 0.0
      %396 = vmatpush1.msra.mxu0 0.0
      %397 = vmatprep.subr.mxu0 0.0
      %398 = vmatpush1.msra.mxu0 0.0
      %399 = vmatprep.subr.mxu0 0.0
      %400 = vmatpush1.msra.mxu0 0.0
      %401 = vmatprep.subr.mxu0 0.0
      %402 = vmatpush1.msra.mxu0 0.0
      %403 = vmatprep.subr.mxu0 0.0
      %404 = vmatpush1.msra.mxu0 0.0
      %405 = vmatprep.subr.mxu0 0.0
      %406 = vmatpush1.msra.mxu0 0.0
      %407 = vmatprep.subr.mxu0 0.0
      %408 = vmatpush1.msra.mxu0 0.0
      %409 = vmatprep.subr.mxu0 0.0
      %410 = vmatpush1.msra.mxu0 0.0
      %411 = vmatprep.subr.mxu0 0.0
      %412 = vmatpush1.msra.mxu0 0.0
      %413 = vmatprep.subr.mxu0 0.0
      %414 = vmatpush1.msra.mxu0 0.0
      %415 = vmatprep.subr.mxu0 0.0
      %416 = vmatpush1.msra.mxu0 0.0
      %417 = vmatprep.subr.mxu0 0.0
      %418 = vmatpush1.msra.mxu0 0.0
      %419 = vmatprep.mubr.f32.mxu0 0.0
      %420 = vmatmul.mubr.f32.gmra.mrb[0].mxu0 %v351
      %v421 = vpop.f32.mrb[0].mxu0
      %v422 = vadd.f32 %v348, %v421
      %v423 = vpop.f32.mrb[0].mxu0
      %424 = vdwg.mxu0
      %vm425 = vcmp.ge.f32.partialorder %v422, 0.0
      %v426 = vmul.f32 %v422, 0.2
      %v427 = vsel %vm425, %v422, %v426
      %v428 = vld [vmem:[%s298] sm:$0xff]
      %v429 = vld [vmem:[%s298 + $0x8] sm:$0xf]
      %vm430 = vcmask 64512
      %v432 = vsel %vm430, %v312, 0
      %v435 = vsel %vm430, %v313, 0
      %437 = vmatprep.subr.mxu0 0.0
      %438 = vmatpush1.msra.mxu0 %v427
      %439 = vmatprep.subr.mxu0 0.0
      %440 = vmatpush1.msra.mxu0 0.0
      %441 = vmatprep.subr.mxu0 0.0
      %442 = vmatpush1.msra.mxu0 0.0
      %443 = vmatprep.subr.mxu0 0.0
      %444 = vmatpush1.msra.mxu0 0.0
      %445 = vmatprep.subr.mxu0 0.0
      %446 = vmatpush1.msra.mxu0 0.0
      %447 = vmatprep.subr.mxu0 0.0
      %448 = vmatpush1.msra.mxu0 0.0
      %449 = vmatprep.subr.mxu0 0.0
      %450 = vmatpush1.msra.mxu0 0.0
      %451 = vmatprep.subr.mxu0 0.0
      %452 = vmatpush1.msra.mxu0 0.0
      %453 = vmatprep.subr.mxu0 0.0
      %454 = vmatpush1.msra.mxu0 0.0
      %455 = vmatprep.subr.mxu0 0.0
      %456 = vmatpush1.msra.mxu0 0.0
      %457 = vmatprep.subr.mxu0 0.0
      %458 = vmatpush1.msra.mxu0 0.0
      %459 = vmatprep.subr.mxu0 0.0
      %460 = vmatpush1.msra.mxu0 0.0
      %461 = vmatprep.subr.mxu0 0.0
      %462 = vmatpush1.msra.mxu0 0.0
      %463 = vmatprep.subr.mxu0 0.0
      %464 = vmatpush1.msra.mxu0 0.0
      %465 = vmatprep.subr.mxu0 0.0
      %466 = vmatpush1.msra.mxu0 0.0
      %467 = vmatprep.subr.mxu0 0.0
      %468 = vmatpush1.msra.mxu0 0.0
      %469 = vmatprep.subr.mxu0 0.0
      %470 = vmatpush1.msra.mxu0 0.0
      %471 = vmatprep.subr.mxu0 0.0
      %472 = vmatpush1.msra.mxu0 0.0
      %473 = vmatprep.subr.mxu0 0.0
      %474 = vmatpush1.msra.mxu0 0.0
      %475 = vmatprep.subr.mxu0 0.0
      %476 = vmatpush1.msra.mxu0 0.0
      %477 = vmatprep.subr.mxu0 0.0
      %478 = vmatpush1.msra.mxu0 0.0
      %479 = vmatprep.subr.mxu0 0.0
      %480 = vmatpush1.msra.mxu0 0.0
      %481 = vmatprep.subr.mxu0 0.0
      %482 = vmatpush1.msra.mxu0 0.0
      %483 = vmatprep.subr.mxu0 0.0
      %484 = vmatpush1.msra.mxu0 0.0
      %485 = vmatprep.subr.mxu0 0.0
      %486 = vmatpush1.msra.mxu0 0.0
      %487 = vmatprep.subr.mxu0 0.0
      %488 = vmatpush1.msra.mxu0 0.0
      %489 = vmatprep.subr.mxu0 0.0
      %490 = vmatpush1.msra.mxu0 0.0
      %491 = vmatprep.subr.mxu0 0.0
      %492 = vmatpush1.msra.mxu0 0.0
      %493 = vmatprep.subr.mxu0 0.0
      %494 = vmatpush1.msra.mxu0 0.0
      %495 = vmatprep.subr.mxu0 0.0
      %496 = vmatpush1.msra.mxu0 0.0
      %497 = vmatprep.subr.mxu0 0.0
      %498 = vmatpush1.msra.mxu0 0.0
      %499 = vmatprep.subr.mxu0 0.0
      %500 = vmatpush1.msra.mxu0 0.0
      %501 = vmatprep.mubr.f32.mxu0 0.0
      %502 = vmatmul.mubr.f32.gmra.mrb[0].mxu0 %v432
      %v503 = vpop.f32.mrb[0].mxu0
      %v504 = vadd.f32 %v428, %v503
      %v505 = vpop.f32.mrb[0].mxu0
      %506 = vmatprep.mubr.f32.mxu0 0.0
      %507 = vmatmul.mubr.f32.gmra.mrb[0].mxu0 %v435
      %v508 = vpop.f32.mrb[0].mxu0
      %v509 = vadd.f32 %v429, %v508
      %v510 = vpop.f32.mrb[0].mxu0
      %511 = vdwg.mxu0
      %vm512 = vcmask 130048
      %513 = vst.msk [vmem:[%s309] sm:$0xff] %vm512, %v504
      %vm514 = vcmask 125952
      %515 = vst.msk [vmem:[%s309 + $0x8] sm:$0xf] %vm514, %v509
      %v516 = vld [vmem:[%s315] sm:$0xf]
      %v517 = vld [vmem:[%s317] sm:$0xf]
      %s518 = scalar_lea.vmem %s284, 12
      %v519 = vld [vmem:[%s518] sm:$0xf]
      %v521 = vrot.slane %v516, 4
      %522 = vrot.lane.b32.xlu0 %v521, 127
      %v523 = vpop.permute.xlu0 %522
      %525 = vrot.lane.b32.xlu0 %v516, 126
      %v526 = vpop.permute.xlu0 %525
      %v529 = vrot.slane %v517, 4
      %531 = vrot.lane.b32.xlu0 %v517, 127
      %v532 = vpop.permute.xlu0 %531
      %534 = vrot.lane.b32.xlu0 %v529, 126
      %v535 = vpop.permute.xlu0 %534
      %v538 = vrot.slane %v519, 4
      %539 = vrot.lane.b32.xlu0 %v538, 127
      %v540 = vpop.permute.xlu0 %539
      %542 = vrot.lane.b32.xlu0 %v519, 126
      %v543 = vpop.permute.xlu0 %542
      %v544 = vsel %vm343, %v516, %v523
      %v545 = vsel %vm343, %v526, %v529
      %v546 = vsel %vm343, %v532, %v535
      %v547 = vsel %vm343, %v519, %v540
      %s548 = scalar_lea.vmem %s291, 8
      %v549 = vld [vmem:[%s548] sm:$0xff]
      %v550 = vsel %vm343, %v543, 0
      %552 = vmatprep.subr.mxu0 0.0
      %553 = vmatpush1.msra.mxu0 %v544
      %554 = vmatprep.subr.mxu0 0.0
      %555 = vmatpush1.msra.mxu0 %v545
      %556 = vmatprep.subr.mxu0 0.0
      %557 = vmatpush1.msra.mxu0 %v546
      %558 = vmatprep.subr.mxu0 0.0
      %559 = vmatpush1.msra.mxu0 %v547
      %560 = vmatprep.subr.mxu0 0.0
      %561 = vmatpush1.msra.mxu0 %v550
      %562 = vmatprep.subr.mxu0 0.0
      %563 = vmatpush1.msra.mxu0 0.0
      %564 = vmatprep.subr.mxu0 0.0
      %565 = vmatpush1.msra.mxu0 0.0
      %566 = vmatprep.subr.mxu0 0.0
      %567 = vmatpush1.msra.mxu0 0.0
      %568 = vmatprep.subr.mxu0 0.0
      %569 = vmatpush1.msra.mxu0 0.0
      %570 = vmatprep.subr.mxu0 0.0
      %571 = vmatpush1.msra.mxu0 0.0
      %572 = vmatprep.subr.mxu0 0.0
      %573 = vmatpush1.msra.mxu0 0.0
      %574 = vmatprep.subr.mxu0 0.0
      %575 = vmatpush1.msra.mxu0 0.0
      %576 = vmatprep.subr.mxu0 0.0
      %577 = vmatpush1.msra.mxu0 0.0
      %578 = vmatprep.subr.mxu0 0.0
      %579 = vmatpush1.msra.mxu0 0.0
      %580 = vmatprep.subr.mxu0 0.0
      %581 = vmatpush1.msra.mxu0 0.0
      %582 = vmatprep.subr.mxu0 0.0
      %583 = vmatpush1.msra.mxu0 0.0
      %584 = vmatprep.subr.mxu0 0.0
      %585 = vmatpush1.msra.mxu0 0.0
      %586 = vmatprep.subr.mxu0 0.0
      %587 = vmatpush1.msra.mxu0 0.0
      %588 = vmatprep.subr.mxu0 0.0
      %589 = vmatpush1.msra.mxu0 0.0
      %590 = vmatprep.subr.mxu0 0.0
      %591 = vmatpush1.msra.mxu0 0.0
      %592 = vmatprep.subr.mxu0 0.0
      %593 = vmatpush1.msra.mxu0 0.0
      %594 = vmatprep.subr.mxu0 0.0
      %595 = vmatpush1.msra.mxu0 0.0
      %596 = vmatprep.subr.mxu0 0.0
      %597 = vmatpush1.msra.mxu0 0.0
      %598 = vmatprep.subr.mxu0 0.0
      %599 = vmatpush1.msra.mxu0 0.0
      %600 = vmatprep.subr.mxu0 0.0
      %601 = vmatpush1.msra.mxu0 0.0
      %602 = vmatprep.subr.mxu0 0.0
      %603 = vmatpush1.msra.mxu0 0.0
      %604 = vmatprep.subr.mxu0 0.0
      %605 = vmatpush1.msra.mxu0 0.0
      %606 = vmatprep.subr.mxu0 0.0
      %607 = vmatpush1.msra.mxu0 0.0
      %608 = vmatprep.subr.mxu0 0.0
      %609 = vmatpush1.msra.mxu0 0.0
      %610 = vmatprep.subr.mxu0 0.0
      %611 = vmatpush1.msra.mxu0 0.0
      %612 = vmatprep.subr.mxu0 0.0
      %613 = vmatpush1.msra.mxu0 0.0
      %614 = vmatprep.subr.mxu0 0.0
      %615 = vmatpush1.msra.mxu0 0.0
      %616 = vmatprep.mubr.f32.mxu0 0.0
      %617 = vmatmul.mubr.f32.gmra.mrb[0].mxu0 %v351
      %v618 = vpop.f32.mrb[0].mxu0
      %v619 = vadd.f32 %v549, %v618
      %v620 = vpop.f32.mrb[0].mxu0
      %621 = vdwg.mxu0
      %vm622 = vcmp.ge.f32.partialorder %v619, 0.0
      %v623 = vmul.f32 %v619, 0.2
      %v624 = vsel %vm622, %v619, %v623
      %s625 = scalar_lea.vmem %s298, 16
      %v626 = vld [vmem:[%s625] sm:$0xff]
      %v627 = vld [vmem:[%s625 + $0x8] sm:$0xf]
      %628 = vmatprep.subr.mxu0 0.0
      %629 = vmatpush1.msra.mxu0 %v624
      %630 = vmatprep.subr.mxu0 0.0
      %631 = vmatpush1.msra.mxu0 0.0
      %632 = vmatprep.subr.mxu0 0.0
      %633 = vmatpush1.msra.mxu0 0.0
      %634 = vmatprep.subr.mxu0 0.0
      %635 = vmatpush1.msra.mxu0 0.0
      %636 = vmatprep.subr.mxu0 0.0
      %637 = vmatpush1.msra.mxu0 0.0
      %638 = vmatprep.subr.mxu0 0.0
      %639 = vmatpush1.msra.mxu0 0.0
      %640 = vmatprep.subr.mxu0 0.0
      %641 = vmatpush1.msra.mxu0 0.0
      %642 = vmatprep.subr.mxu0 0.0
      %643 = vmatpush1.msra.mxu0 0.0
      %644 = vmatprep.subr.mxu0 0.0
      %645 = vmatpush1.msra.mxu0 0.0
      %646 = vmatprep.subr.mxu0 0.0
      %647 = vmatpush1.msra.mxu0 0.0
      %648 = vmatprep.subr.mxu0 0.0
      %649 = vmatpush1.msra.mxu0 0.0
      %650 = vmatprep.subr.mxu0 0.0
      %651 = vmatpush1.msra.mxu0 0.0
      %652 = vmatprep.subr.mxu0 0.0
      %653 = vmatpush1.msra.mxu0 0.0
      %654 = vmatprep.subr.mxu0 0.0
      %655 = vmatpush1.msra.mxu0 0.0
      %656 = vmatprep.subr.mxu0 0.0
      %657 = vmatpush1.msra.mxu0 0.0
      %658 = vmatprep.subr.mxu0 0.0
      %659 = vmatpush1.msra.mxu0 0.0
      %660 = vmatprep.subr.mxu0 0.0
      %661 = vmatpush1.msra.mxu0 0.0
      %662 = vmatprep.subr.mxu0 0.0
      %663 = vmatpush1.msra.mxu0 0.0
      %664 = vmatprep.subr.mxu0 0.0
      %665 = vmatpush1.msra.mxu0 0.0
      %666 = vmatprep.subr.mxu0 0.0
      %667 = vmatpush1.msra.mxu0 0.0
      %668 = vmatprep.subr.mxu0 0.0
      %669 = vmatpush1.msra.mxu0 0.0
      %670 = vmatprep.subr.mxu0 0.0
      %671 = vmatpush1.msra.mxu0 0.0
      %672 = vmatprep.subr.mxu0 0.0
      %673 = vmatpush1.msra.mxu0 0.0
      %674 = vmatprep.subr.mxu0 0.0
      %675 = vmatpush1.msra.mxu0 0.0
      %676 = vmatprep.subr.mxu0 0.0
      %677 = vmatpush1.msra.mxu0 0.0
      %678 = vmatprep.subr.mxu0 0.0
      %679 = vmatpush1.msra.mxu0 0.0
      %680 = vmatprep.subr.mxu0 0.0
      %681 = vmatpush1.msra.mxu0 0.0
      %682 = vmatprep.subr.mxu0 0.0
      %683 = vmatpush1.msra.mxu0 0.0
      %684 = vmatprep.subr.mxu0 0.0
      %685 = vmatpush1.msra.mxu0 0.0
      %686 = vmatprep.subr.mxu0 0.0
      %687 = vmatpush1.msra.mxu0 0.0
      %688 = vmatprep.subr.mxu0 0.0
      %689 = vmatpush1.msra.mxu0 0.0
      %690 = vmatprep.subr.mxu0 0.0
      %691 = vmatpush1.msra.mxu0 0.0
      %692 = vmatprep.mubr.f32.mxu0 0.0
      %693 = vmatmul.mubr.f32.gmra.mrb[0].mxu0 %v432
      %v694 = vpop.f32.mrb[0].mxu0
      %v695 = vadd.f32 %v626, %v694
      %v696 = vpop.f32.mrb[0].mxu0
      %697 = vmatprep.mubr.f32.mxu0 0.0
      %698 = vmatmul.mubr.f32.gmra.mrb[0].mxu0 %v435
      %v699 = vpop.f32.mrb[0].mxu0
      %v700 = vadd.f32 %v627, %v699
      %v701 = vpop.f32.mrb[0].mxu0
      %702 = vdwg.mxu0
      %s703 = scalar_lea.vmem %s309, 16
      %704 = vst.msk [vmem:[%s703] sm:$0xff] %vm512, %v695
      %705 = vst.msk [vmem:[%s703 + $0x8] sm:$0xf] %vm514, %v700
      %v706 = vld [vmem:[%s317] sm:$0xf]
      %v707 = vld [vmem:[%s518] sm:$0xf]
      %s708 = scalar_lea.vmem %s284, 16
      %v709 = vld [vmem:[%s708] sm:$0xf]
      %v711 = vrot.slane %v706, 4
      %712 = vrot.lane.b32.xlu0 %v711, 127
      %v713 = vpop.permute.xlu0 %712
      %715 = vrot.lane.b32.xlu0 %v706, 126
      %v716 = vpop.permute.xlu0 %715
      %v719 = vrot.slane %v707, 4
      %721 = vrot.lane.b32.xlu0 %v707, 127
      %v722 = vpop.permute.xlu0 %721
      %724 = vrot.lane.b32.xlu0 %v719, 126
      %v725 = vpop.permute.xlu0 %724
      %v728 = vrot.slane %v709, 4
      %729 = vrot.lane.b32.xlu0 %v728, 127
      %v730 = vpop.permute.xlu0 %729
      %732 = vrot.lane.b32.xlu0 %v709, 126
      %v733 = vpop.permute.xlu0 %732
      %v734 = vsel %vm343, %v706, %v713
      %v735 = vsel %vm343, %v716, %v719
      %v736 = vsel %vm343, %v722, %v725
      %v737 = vsel %vm343, %v709, %v730
      %s738 = scalar_lea.vmem %s291, 16
      %v739 = vld [vmem:[%s738] sm:$0xff]
      %v740 = vsel %vm343, %v733, 0
      %742 = vmatprep.subr.mxu0 0.0
      %743 = vmatpush1.msra.mxu0 %v734
      %744 = vmatprep.subr.mxu0 0.0
      %745 = vmatpush1.msra.mxu0 %v735
      %746 = vmatprep.subr.mxu0 0.0
      %747 = vmatpush1.msra.mxu0 %v736
      %748 = vmatprep.subr.mxu0 0.0
      %749 = vmatpush1.msra.mxu0 %v737
      %750 = vmatprep.subr.mxu0 0.0
      %751 = vmatpush1.msra.mxu0 %v740
      %752 = vmatprep.subr.mxu0 0.0
      %753 = vmatpush1.msra.mxu0 0.0
      %754 = vmatprep.subr.mxu0 0.0
      %755 = vmatpush1.msra.mxu0 0.0
      %756 = vmatprep.subr.mxu0 0.0
      %757 = vmatpush1.msra.mxu0 0.0
      %758 = vmatprep.subr.mxu0 0.0
      %759 = vmatpush1.msra.mxu0 0.0
      %760 = vmatprep.subr.mxu0 0.0
      %761 = vmatpush1.msra.mxu0 0.0
      %762 = vmatprep.subr.mxu0 0.0
      %763 = vmatpush1.msra.mxu0 0.0
      %764 = vmatprep.subr.mxu0 0.0
      %765 = vmatpush1.msra.mxu0 0.0
      %766 = vmatprep.subr.mxu0 0.0
      %767 = vmatpush1.msra.mxu0 0.0
      %768 = vmatprep.subr.mxu0 0.0
      %769 = vmatpush1.msra.mxu0 0.0
      %770 = vmatprep.subr.mxu0 0.0
      %771 = vmatpush1.msra.mxu0 0.0
      %772 = vmatprep.subr.mxu0 0.0
      %773 = vmatpush1.msra.mxu0 0.0
      %774 = vmatprep.subr.mxu0 0.0
      %775 = vmatpush1.msra.mxu0 0.0
      %776 = vmatprep.subr.mxu0 0.0
      %777 = vmatpush1.msra.mxu0 0.0
      %778 = vmatprep.subr.mxu0 0.0
      %779 = vmatpush1.msra.mxu0 0.0
      %780 = vmatprep.subr.mxu0 0.0
      %781 = vmatpush1.msra.mxu0 0.0
      %782 = vmatprep.subr.mxu0 0.0
      %783 = vmatpush1.msra.mxu0 0.0
      %784 = vmatprep.subr.mxu0 0.0
      %785 = vmatpush1.msra.mxu0 0.0
      %786 = vmatprep.subr.mxu0 0.0
      %787 = vmatpush1.msra.mxu0 0.0
      %788 = vmatprep.subr.mxu0 0.0
      %789 = vmatpush1.msra.mxu0 0.0
      %790 = vmatprep.subr.mxu0 0.0
      %791 = vmatpush1.msra.mxu0 0.0
      %792 = vmatprep.subr.mxu0 0.0
      %793 = vmatpush1.msra.mxu0 0.0
      %794 = vmatprep.subr.mxu0 0.0
      %795 = vmatpush1.msra.mxu0 0.0
      %796 = vmatprep.subr.mxu0 0.0
      %797 = vmatpush1.msra.mxu0 0.0
      %798 = vmatprep.subr.mxu0 0.0
      %799 = vmatpush1.msra.mxu0 0.0
      %800 = vmatprep.subr.mxu0 0.0
      %801 = vmatpush1.msra.mxu0 0.0
      %802 = vmatprep.subr.mxu0 0.0
      %803 = vmatpush1.msra.mxu0 0.0
      %804 = vmatprep.subr.mxu0 0.0
      %805 = vmatpush1.msra.mxu0 0.0
      %806 = vmatprep.mubr.f32.mxu0 0.0
      %807 = vmatmul.mubr.f32.gmra.mrb[0].mxu0 %v351
      %v808 = vpop.f32.mrb[0].mxu0
      %v809 = vadd.f32 %v739, %v808
      %v810 = vpop.f32.mrb[0].mxu0
      %811 = vdwg.mxu0
      %vm812 = vcmp.ge.f32.partialorder %v809, 0.0
      %v813 = vmul.f32 %v809, 0.2
      %v814 = vsel %vm812, %v809, %v813
      %s815 = scalar_lea.vmem %s298, 32
      %v816 = vld [vmem:[%s815] sm:$0xff]
      %v817 = vld [vmem:[%s815 + $0x8] sm:$0xf]
      %818 = vmatprep.subr.mxu0 0.0
      %819 = vmatpush1.msra.mxu0 %v814
      %820 = vmatprep.subr.mxu0 0.0
      %821 = vmatpush1.msra.mxu0 0.0
      %822 = vmatprep.subr.mxu0 0.0
      %823 = vmatpush1.msra.mxu0 0.0
      %824 = vmatprep.subr.mxu0 0.0
      %825 = vmatpush1.msra.mxu0 0.0
      %826 = vmatprep.subr.mxu0 0.0
      %827 = vmatpush1.msra.mxu0 0.0
      %828 = vmatprep.subr.mxu0 0.0
      %829 = vmatpush1.msra.mxu0 0.0
      %830 = vmatprep.subr.mxu0 0.0
      %831 = vmatpush1.msra.mxu0 0.0
      %832 = vmatprep.subr.mxu0 0.0
      %833 = vmatpush1.msra.mxu0 0.0
      %834 = vmatprep.subr.mxu0 0.0
      %835 = vmatpush1.msra.mxu0 0.0
      %836 = vmatprep.subr.mxu0 0.0
      %837 = vmatpush1.msra.mxu0 0.0
      %838 = vmatprep.subr.mxu0 0.0
      %839 = vmatpush1.msra.mxu0 0.0
      %840 = vmatprep.subr.mxu0 0.0
      %841 = vmatpush1.msra.mxu0 0.0
      %842 = vmatprep.subr.mxu0 0.0
      %843 = vmatpush1.msra.mxu0 0.0
      %844 = vmatprep.subr.mxu0 0.0
      %845 = vmatpush1.msra.mxu0 0.0
      %846 = vmatprep.subr.mxu0 0.0
      %847 = vmatpush1.msra.mxu0 0.0
      %848 = vmatprep.subr.mxu0 0.0
      %849 = vmatpush1.msra.mxu0 0.0
      %850 = vmatprep.subr.mxu0 0.0
      %851 = vmatpush1.msra.mxu0 0.0
      %852 = vmatprep.subr.mxu0 0.0
      %853 = vmatpush1.msra.mxu0 0.0
      %854 = vmatprep.subr.mxu0 0.0
      %855 = vmatpush1.msra.mxu0 0.0
      %856 = vmatprep.subr.mxu0 0.0
      %857 = vmatpush1.msra.mxu0 0.0
      %858 = vmatprep.subr.mxu0 0.0
      %859 = vmatpush1.msra.mxu0 0.0
      %860 = vmatprep.subr.mxu0 0.0
      %861 = vmatpush1.msra.mxu0 0.0
      %862 = vmatprep.subr.mxu0 0.0
      %863 = vmatpush1.msra.mxu0 0.0
      %864 = vmatprep.subr.mxu0 0.0
      %865 = vmatpush1.msra.mxu0 0.0
      %866 = vmatprep.subr.mxu0 0.0
      %867 = vmatpush1.msra.mxu0 0.0
      %868 = vmatprep.subr.mxu0 0.0
      %869 = vmatpush1.msra.mxu0 0.0
      %870 = vmatprep.subr.mxu0 0.0
      %871 = vmatpush1.msra.mxu0 0.0
      %872 = vmatprep.subr.mxu0 0.0
      %873 = vmatpush1.msra.mxu0 0.0
      %874 = vmatprep.subr.mxu0 0.0
      %875 = vmatpush1.msra.mxu0 0.0
      %876 = vmatprep.subr.mxu0 0.0
      %877 = vmatpush1.msra.mxu0 0.0
      %878 = vmatprep.subr.mxu0 0.0
      %879 = vmatpush1.msra.mxu0 0.0
      %880 = vmatprep.subr.mxu0 0.0
      %881 = vmatpush1.msra.mxu0 0.0
      %882 = vmatprep.mubr.f32.mxu0 0.0
      %883 = vmatmul.mubr.f32.gmra.mrb[0].mxu0 %v432
      %v884 = vpop.f32.mrb[0].mxu0
      %v885 = vadd.f32 %v816, %v884
      %v886 = vpop.f32.mrb[0].mxu0
      %887 = vmatprep.mubr.f32.mxu0 0.0
      %888 = vmatmul.mubr.f32.gmra.mrb[0].mxu0 %v435
      %v889 = vpop.f32.mrb[0].mxu0
      %v890 = vadd.f32 %v817, %v889
      %v891 = vpop.f32.mrb[0].mxu0
      %892 = vdwg.mxu0
      %s893 = scalar_lea.vmem %s309, 32
      %894 = vst.msk [vmem:[%s893] sm:$0xff] %vm512, %v885
      %895 = vst.msk [vmem:[%s893 + $0x8] sm:$0xf] %vm514, %v890
      %v896 = vld [vmem:[%s518] sm:$0xf]
      %v897 = vld [vmem:[%s708] sm:$0xf]
      %s898 = scalar_lea.vmem %s284, 20
      %v899 = vld [vmem:[%s898] sm:$0xf]
      %v901 = vrot.slane %v896, 4
      %902 = vrot.lane.b32.xlu0 %v901, 127
      %v903 = vpop.permute.xlu0 %902
      %905 = vrot.lane.b32.xlu0 %v896, 126
      %v906 = vpop.permute.xlu0 %905
      %v909 = vrot.slane %v897, 4
      %911 = vrot.lane.b32.xlu0 %v897, 127
      %v912 = vpop.permute.xlu0 %911
      %914 = vrot.lane.b32.xlu0 %v909, 126
      %v915 = vpop.permute.xlu0 %914
      %v918 = vrot.slane %v899, 4
      %919 = vrot.lane.b32.xlu0 %v918, 127
      %v920 = vpop.permute.xlu0 %919
      %922 = vrot.lane.b32.xlu0 %v899, 126
      %v923 = vpop.permute.xlu0 %922
      %v924 = vsel %vm343, %v896, %v903
      %v925 = vsel %vm343, %v906, %v909
      %v926 = vsel %vm343, %v912, %v915
      %v927 = vsel %vm343, %v899, %v920
      %s928 = scalar_lea.vmem %s291, 24
      %v929 = vld [vmem:[%s928] sm:$0xff]
      %v930 = vsel %vm343, %v923, 0
      %932 = vmatprep.subr.mxu0 0.0
      %933 = vmatpush1.msra.mxu0 %v924
      %934 = vmatprep.subr.mxu0 0.0
      %935 = vmatpush1.msra.mxu0 %v925
      %936 = vmatprep.subr.mxu0 0.0
      %937 = vmatpush1.msra.mxu0 %v926
      %938 = vmatprep.subr.mxu0 0.0
      %939 = vmatpush1.msra.mxu0 %v927
      %940 = vmatprep.subr.mxu0 0.0
      %941 = vmatpush1.msra.mxu0 %v930
      %942 = vmatprep.subr.mxu0 0.0
      %943 = vmatpush1.msra.mxu0 0.0
      %944 = vmatprep.subr.mxu0 0.0
      %945 = vmatpush1.msra.mxu0 0.0
      %946 = vmatprep.subr.mxu0 0.0
      %947 = vmatpush1.msra.mxu0 0.0
      %948 = vmatprep.subr.mxu0 0.0
      %949 = vmatpush1.msra.mxu0 0.0
      %950 = vmatprep.subr.mxu0 0.0
      %951 = vmatpush1.msra.mxu0 0.0
      %952 = vmatprep.subr.mxu0 0.0
      %953 = vmatpush1.msra.mxu0 0.0
      %954 = vmatprep.subr.mxu0 0.0
      %955 = vmatpush1.msra.mxu0 0.0
      %956 = vmatprep.subr.mxu0 0.0
      %957 = vmatpush1.msra.mxu0 0.0
      %958 = vmatprep.subr.mxu0 0.0
      %959 = vmatpush1.msra.mxu0 0.0
      %960 = vmatprep.subr.mxu0 0.0
      %961 = vmatpush1.msra.mxu0 0.0
      %962 = vmatprep.subr.mxu0 0.0
      %963 = vmatpush1.msra.mxu0 0.0
      %964 = vmatprep.subr.mxu0 0.0
      %965 = vmatpush1.msra.mxu0 0.0
      %966 = vmatprep.subr.mxu0 0.0
      %967 = vmatpush1.msra.mxu0 0.0
      %968 = vmatprep.subr.mxu0 0.0
      %969 = vmatpush1.msra.mxu0 0.0
      %970 = vmatprep.subr.mxu0 0.0
      %971 = vmatpush1.msra.mxu0 0.0
      %972 = vmatprep.subr.mxu0 0.0
      %973 = vmatpush1.msra.mxu0 0.0
      %974 = vmatprep.subr.mxu0 0.0
      %975 = vmatpush1.msra.mxu0 0.0
      %976 = vmatprep.subr.mxu0 0.0
      %977 = vmatpush1.msra.mxu0 0.0
      %978 = vmatprep.subr.mxu0 0.0
      %979 = vmatpush1.msra.mxu0 0.0
      %980 = vmatprep.subr.mxu0 0.0
      %981 = vmatpush1.msra.mxu0 0.0
      %982 = vmatprep.subr.mxu0 0.0
      %983 = vmatpush1.msra.mxu0 0.0
      %984 = vmatprep.subr.mxu0 0.0
      %985 = vmatpush1.msra.mxu0 0.0
      %986 = vmatprep.subr.mxu0 0.0
      %987 = vmatpush1.msra.mxu0 0.0
      %988 = vmatprep.subr.mxu0 0.0
      %989 = vmatpush1.msra.mxu0 0.0
      %990 = vmatprep.subr.mxu0 0.0
      %991 = vmatpush1.msra.mxu0 0.0
      %992 = vmatprep.subr.mxu0 0.0
      %993 = vmatpush1.msra.mxu0 0.0
      %994 = vmatprep.subr.mxu0 0.0
      %995 = vmatpush1.msra.mxu0 0.0
      %996 = vmatprep.mubr.f32.mxu0 0.0
      %997 = vmatmul.mubr.f32.gmra.mrb[0].mxu0 %v351
      %v998 = vpop.f32.mrb[0].mxu0
      %v999 = vadd.f32 %v929, %v998
      %v1000 = vpop.f32.mrb[0].mxu0
      %1001 = vdwg.mxu0
      %vm1002 = vcmp.ge.f32.partialorder %v999, 0.0
      %v1003 = vmul.f32 %v999, 0.2
      %v1004 = vsel %vm1002, %v999, %v1003
      %s1005 = scalar_lea.vmem %s298, 48
      %v1006 = vld [vmem:[%s1005] sm:$0xff]
      %v1007 = vld [vmem:[%s1005 + $0x8] sm:$0xf]
      %1008 = vmatprep.subr.mxu0 0.0
      %1009 = vmatpush1.msra.mxu0 %v1004
      %1010 = vmatprep.subr.mxu0 0.0
      %1011 = vmatpush1.msra.mxu0 0.0
      %1012 = vmatprep.subr.mxu0 0.0
      %1013 = vmatpush1.msra.mxu0 0.0
      %1014 = vmatprep.subr.mxu0 0.0
      %1015 = vmatpush1.msra.mxu0 0.0
      %1016 = vmatprep.subr.mxu0 0.0
      %1017 = vmatpush1.msra.mxu0 0.0
      %1018 = vmatprep.subr.mxu0 0.0
      %1019 = vmatpush1.msra.mxu0 0.0
      %1020 = vmatprep.subr.mxu0 0.0
      %1021 = vmatpush1.msra.mxu0 0.0
      %1022 = vmatprep.subr.mxu0 0.0
      %1023 = vmatpush1.msra.mxu0 0.0
      %1024 = vmatprep.subr.mxu0 0.0
      %1025 = vmatpush1.msra.mxu0 0.0
      %1026 = vmatprep.subr.mxu0 0.0
      %1027 = vmatpush1.msra.mxu0 0.0
      %1028 = vmatprep.subr.mxu0 0.0
      %1029 = vmatpush1.msra.mxu0 0.0
      %1030 = vmatprep.subr.mxu0 0.0
      %1031 = vmatpush1.msra.mxu0 0.0
      %1032 = vmatprep.subr.mxu0 0.0
      %1033 = vmatpush1.msra.mxu0 0.0
      %1034 = vmatprep.subr.mxu0 0.0
      %1035 = vmatpush1.msra.mxu0 0.0
      %1036 = vmatprep.subr.mxu0 0.0
      %1037 = vmatpush1.msra.mxu0 0.0
      %1038 = vmatprep.subr.mxu0 0.0
      %1039 = vmatpush1.msra.mxu0 0.0
      %1040 = vmatprep.subr.mxu0 0.0
      %1041 = vmatpush1.msra.mxu0 0.0
      %1042 = vmatprep.subr.mxu0 0.0
      %1043 = vmatpush1.msra.mxu0 0.0
      %1044 = vmatprep.subr.mxu0 0.0
      %1045 = vmatpush1.msra.mxu0 0.0
      %1046 = vmatprep.subr.mxu0 0.0
      %1047 = vmatpush1.msra.mxu0 0.0
      %1048 = vmatprep.subr.mxu0 0.0
      %1049 = vmatpush1.msra.mxu0 0.0
      %1050 = vmatprep.subr.mxu0 0.0
      %1051 = vmatpush1.msra.mxu0 0.0
      %1052 = vmatprep.subr.mxu0 0.0
      %1053 = vmatpush1.msra.mxu0 0.0
      %1054 = vmatprep.subr.mxu0 0.0
      %1055 = vmatpush1.msra.mxu0 0.0
      %1056 = vmatprep.subr.mxu0 0.0
      %1057 = vmatpush1.msra.mxu0 0.0
      %1058 = vmatprep.subr.mxu0 0.0
      %1059 = vmatpush1.msra.mxu0 0.0
      %1060 = vmatprep.subr.mxu0 0.0
      %1061 = vmatpush1.msra.mxu0 0.0
      %1062 = vmatprep.subr.mxu0 0.0
      %1063 = vmatpush1.msra.mxu0 0.0
      %1064 = vmatprep.subr.mxu0 0.0
      %1065 = vmatpush1.msra.mxu0 0.0
      %1066 = vmatprep.subr.mxu0 0.0
      %1067 = vmatpush1.msra.mxu0 0.0
      %1068 = vmatprep.subr.mxu0 0.0
      %1069 = vmatpush1.msra.mxu0 0.0
      %1070 = vmatprep.subr.mxu0 0.0
      %1071 = vmatpush1.msra.mxu0 0.0
      %1072 = vmatprep.mubr.f32.mxu0 0.0
      %1073 = vmatmul.mubr.f32.gmra.mrb[0].mxu0 %v432
      %v1074 = vpop.f32.mrb[0].mxu0
      %v1075 = vadd.f32 %v1006, %v1074
      %v1076 = vpop.f32.mrb[0].mxu0
      %1077 = vmatprep.mubr.f32.mxu0 0.0
      %1078 = vmatmul.mubr.f32.gmra.mrb[0].mxu0 %v435
      %v1079 = vpop.f32.mrb[0].mxu0
      %v1080 = vadd.f32 %v1007, %v1079
      %v1081 = vpop.f32.mrb[0].mxu0
      %1082 = vdwg.mxu0
      %s1083 = scalar_lea.vmem %s309, 48
      %1084 = vst.msk [vmem:[%s1083] sm:$0xff] %vm512, %v1075
      %1085 = vst.msk [vmem:[%s1083 + $0x8] sm:$0xf] %vm514, %v1080
      %v1086 = vld [vmem:[%s708] sm:$0xf]
      %v1087 = vld [vmem:[%s898] sm:$0xf]
      %s1088 = scalar_lea.vmem %s284, 24
      %v1089 = vld [vmem:[%s1088] sm:$0xf]
      %v1091 = vrot.slane %v1086, 4
      %1092 = vrot.lane.b32.xlu0 %v1091, 127
      %v1093 = vpop.permute.xlu0 %1092
      %1095 = vrot.lane.b32.xlu0 %v1086, 126
      %v1096 = vpop.permute.xlu0 %1095
      %v1099 = vrot.slane %v1087, 4
      %1101 = vrot.lane.b32.xlu0 %v1087, 127
      %v1102 = vpop.permute.xlu0 %1101
      %1104 = vrot.lane.b32.xlu0 %v1099, 126
      %v1105 = vpop.permute.xlu0 %1104
      %v1108 = vrot.slane %v1089, 4
      %1109 = vrot.lane.b32.xlu0 %v1108, 127
      %v1110 = vpop.permute.xlu0 %1109
      %1112 = vrot.lane.b32.xlu0 %v1089, 126
      %v1113 = vpop.permute.xlu0 %1112
      %v1114 = vsel %vm343, %v1086, %v1093
      %v1115 = vsel %vm343, %v1096, %v1099
      %v1116 = vsel %vm343, %v1102, %v1105
      %v1117 = vsel %vm343, %v1089, %v1110
      %s1118 = scalar_lea.vmem %s291, 32
      %v1119 = vld [vmem:[%s1118] sm:$0xff]
      %v1120 = vsel %vm343, %v1113, 0
      %1122 = vmatprep.subr.mxu0 0.0
      %1123 = vmatpush1.msra.mxu0 %v1114
      %1124 = vmatprep.subr.mxu0 0.0
      %1125 = vmatpush1.msra.mxu0 %v1115
      %1126 = vmatprep.subr.mxu0 0.0
      %1127 = vmatpush1.msra.mxu0 %v1116
      %1128 = vmatprep.subr.mxu0 0.0
      %1129 = vmatpush1.msra.mxu0 %v1117
      %1130 = vmatprep.subr.mxu0 0.0
      %1131 = vmatpush1.msra.mxu0 %v1120
      %1132 = vmatprep.subr.mxu0 0.0
      %1133 = vmatpush1.msra.mxu0 0.0
      %1134 = vmatprep.subr.mxu0 0.0
      %1135 = vmatpush1.msra.mxu0 0.0
      %1136 = vmatprep.subr.mxu0 0.0
      %1137 = vmatpush1.msra.mxu0 0.0
      %1138 = vmatprep.subr.mxu0 0.0
      %1139 = vmatpush1.msra.mxu0 0.0
      %1140 = vmatprep.subr.mxu0 0.0
      %1141 = vmatpush1.msra.mxu0 0.0
      %1142 = vmatprep.subr.mxu0 0.0
      %1143 = vmatpush1.msra.mxu0 0.0
      %1144 = vmatprep.subr.mxu0 0.0
      %1145 = vmatpush1.msra.mxu0 0.0
      %1146 = vmatprep.subr.mxu0 0.0
      %1147 = vmatpush1.msra.mxu0 0.0
      %1148 = vmatprep.subr.mxu0 0.0
      %1149 = vmatpush1.msra.mxu0 0.0
      %1150 = vmatprep.subr.mxu0 0.0
      %1151 = vmatpush1.msra.mxu0 0.0
      %1152 = vmatprep.subr.mxu0 0.0
      %1153 = vmatpush1.msra.mxu0 0.0
      %1154 = vmatprep.subr.mxu0 0.0
      %1155 = vmatpush1.msra.mxu0 0.0
      %1156 = vmatprep.subr.mxu0 0.0
      %1157 = vmatpush1.msra.mxu0 0.0
      %1158 = vmatprep.subr.mxu0 0.0
      %1159 = vmatpush1.msra.mxu0 0.0
      %1160 = vmatprep.subr.mxu0 0.0
      %1161 = vmatpush1.msra.mxu0 0.0
      %1162 = vmatprep.subr.mxu0 0.0
      %1163 = vmatpush1.msra.mxu0 0.0
      %1164 = vmatprep.subr.mxu0 0.0
      %1165 = vmatpush1.msra.mxu0 0.0
      %1166 = vmatprep.subr.mxu0 0.0
      %1167 = vmatpush1.msra.mxu0 0.0
      %1168 = vmatprep.subr.mxu0 0.0
      %1169 = vmatpush1.msra.mxu0 0.0
      %1170 = vmatprep.subr.mxu0 0.0
      %1171 = vmatpush1.msra.mxu0 0.0
      %1172 = vmatprep.subr.mxu0 0.0
      %1173 = vmatpush1.msra.mxu0 0.0
      %1174 = vmatprep.subr.mxu0 0.0
      %1175 = vmatpush1.msra.mxu0 0.0
      %1176 = vmatprep.subr.mxu0 0.0
      %1177 = vmatpush1.msra.mxu0 0.0
      %1178 = vmatprep.subr.mxu0 0.0
      %1179 = vmatpush1.msra.mxu0 0.0
      %1180 = vmatprep.subr.mxu0 0.0
      %1181 = vmatpush1.msra.mxu0 0.0
      %1182 = vmatprep.subr.mxu0 0.0
      %1183 = vmatpush1.msra.mxu0 0.0
      %1184 = vmatprep.subr.mxu0 0.0
      %1185 = vmatpush1.msra.mxu0 0.0
      %1186 = vmatprep.mubr.f32.mxu0 0.0
      %1187 = vmatmul.mubr.f32.gmra.mrb[0].mxu0 %v351
      %v1188 = vpop.f32.mrb[0].mxu0
      %v1189 = vadd.f32 %v1119, %v1188
      %v1190 = vpop.f32.mrb[0].mxu0
      %1191 = vdwg.mxu0
      %vm1192 = vcmp.ge.f32.partialorder %v1189, 0.0
      %v1193 = vmul.f32 %v1189, 0.2
      %v1194 = vsel %vm1192, %v1189, %v1193
      %s1195 = scalar_lea.vmem %s298, 64
      %v1196 = vld [vmem:[%s1195] sm:$0xff]
      %v1197 = vld [vmem:[%s1195 + $0x8] sm:$0xf]
      %1198 = vmatprep.subr.mxu0 0.0
      %1199 = vmatpush1.msra.mxu0 %v1194
      %1200 = vmatprep.subr.mxu0 0.0
      %1201 = vmatpush1.msra.mxu0 0.0
      %1202 = vmatprep.subr.mxu0 0.0
      %1203 = vmatpush1.msra.mxu0 0.0
      %1204 = vmatprep.subr.mxu0 0.0
      %1205 = vmatpush1.msra.mxu0 0.0
      %1206 = vmatprep.subr.mxu0 0.0
      %1207 = vmatpush1.msra.mxu0 0.0
      %1208 = vmatprep.subr.mxu0 0.0
      %1209 = vmatpush1.msra.mxu0 0.0
      %1210 = vmatprep.subr.mxu0 0.0
      %1211 = vmatpush1.msra.mxu0 0.0
      %1212 = vmatprep.subr.mxu0 0.0
      %1213 = vmatpush1.msra.mxu0 0.0
      %1214 = vmatprep.subr.mxu0 0.0
      %1215 = vmatpush1.msra.mxu0 0.0
      %1216 = vmatprep.subr.mxu0 0.0
      %1217 = vmatpush1.msra.mxu0 0.0
      %1218 = vmatprep.subr.mxu0 0.0
      %1219 = vmatpush1.msra.mxu0 0.0
      %1220 = vmatprep.subr.mxu0 0.0
      %1221 = vmatpush1.msra.mxu0 0.0
      %1222 = vmatprep.subr.mxu0 0.0
      %1223 = vmatpush1.msra.mxu0 0.0
      %1224 = vmatprep.subr.mxu0 0.0
      %1225 = vmatpush1.msra.mxu0 0.0
      %1226 = vmatprep.subr.mxu0 0.0
      %1227 = vmatpush1.msra.mxu0 0.0
      %1228 = vmatprep.subr.mxu0 0.0
      %1229 = vmatpush1.msra.mxu0 0.0
      %1230 = vmatprep.subr.mxu0 0.0
      %1231 = vmatpush1.msra.mxu0 0.0
      %1232 = vmatprep.subr.mxu0 0.0
      %1233 = vmatpush1.msra.mxu0 0.0
      %1234 = vmatprep.subr.mxu0 0.0
      %1235 = vmatpush1.msra.mxu0 0.0
      %1236 = vmatprep.subr.mxu0 0.0
      %1237 = vmatpush1.msra.mxu0 0.0
      %1238 = vmatprep.subr.mxu0 0.0
      %1239 = vmatpush1.msra.mxu0 0.0
      %1240 = vmatprep.subr.mxu0 0.0
      %1241 = vmatpush1.msra.mxu0 0.0
      %1242 = vmatprep.subr.mxu0 0.0
      %1243 = vmatpush1.msra.mxu0 0.0
      %1244 = vmatprep.subr.mxu0 0.0
      %1245 = vmatpush1.msra.mxu0 0.0
      %1246 = vmatprep.subr.mxu0 0.0
      %1247 = vmatpush1.msra.mxu0 0.0
      %1248 = vmatprep.subr.mxu0 0.0
      %1249 = vmatpush1.msra.mxu0 0.0
      %1250 = vmatprep.subr.mxu0 0.0
      %1251 = vmatpush1.msra.mxu0 0.0
      %1252 = vmatprep.subr.mxu0 0.0
      %1253 = vmatpush1.msra.mxu0 0.0
      %1254 = vmatprep.subr.mxu0 0.0
      %1255 = vmatpush1.msra.mxu0 0.0
      %1256 = vmatprep.subr.mxu0 0.0
      %1257 = vmatpush1.msra.mxu0 0.0
      %1258 = vmatprep.subr.mxu0 0.0
      %1259 = vmatpush1.msra.mxu0 0.0
      %1260 = vmatprep.subr.mxu0 0.0
      %1261 = vmatpush1.msra.mxu0 0.0
      %1262 = vmatprep.mubr.f32.mxu0 0.0
      %1263 = vmatmul.mubr.f32.gmra.mrb[0].mxu0 %v432
      %v1264 = vpop.f32.mrb[0].mxu0
      %v1265 = vadd.f32 %v1196, %v1264
      %v1266 = vpop.f32.mrb[0].mxu0
      %1267 = vmatprep.mubr.f32.mxu0 0.0
      %1268 = vmatmul.mubr.f32.gmra.mrb[0].mxu0 %v435
      %v1269 = vpop.f32.mrb[0].mxu0
      %v1270 = vadd.f32 %v1197, %v1269
      %v1271 = vpop.f32.mrb[0].mxu0
      %1272 = vdwg.mxu0
      %s1273 = scalar_lea.vmem %s309, 64
      %1274 = vst.msk [vmem:[%s1273] sm:$0xff] %vm512, %v1265
      %1275 = vst.msk [vmem:[%s1273 + $0x8] sm:$0xf] %vm514, %v1270
      %v1276 = vld [vmem:[%s898] sm:$0xf]
      %v1277 = vld [vmem:[%s1088] sm:$0xf]
      %s1278 = scalar_lea.vmem %s284, 28
      %v1279 = vld [vmem:[%s1278] sm:$0xf]
      %v1281 = vrot.slane %v1276, 4
      %1282 = vrot.lane.b32.xlu0 %v1281, 127
      %v1283 = vpop.permute.xlu0 %1282
      %1285 = vrot.lane.b32.xlu0 %v1276, 126
      %v1286 = vpop.permute.xlu0 %1285
      %v1289 = vrot.slane %v1277, 4
      %1291 = vrot.lane.b32.xlu0 %v1277, 127
      %v1292 = vpop.permute.xlu0 %1291
      %1294 = vrot.lane.b32.xlu0 %v1289, 126
      %v1295 = vpop.permute.xlu0 %1294
      %v1298 = vrot.slane %v1279, 4
      %1299 = vrot.lane.b32.xlu0 %v1298, 127
      %v1300 = vpop.permute.xlu0 %1299
      %1302 = vrot.lane.b32.xlu0 %v1279, 126
      %v1303 = vpop.permute.xlu0 %1302
      %v1304 = vsel %vm343, %v1276, %v1283
      %v1305 = vsel %vm343, %v1286, %v1289
      %v1306 = vsel %vm343, %v1292, %v1295
      %v1307 = vsel %vm343, %v1279, %v1300
      %s1308 = scalar_lea.vmem %s291, 40
      %v1309 = vld [vmem:[%s1308] sm:$0xff]
      %v1310 = vsel %vm343, %v1303, 0
      %1312 = vmatprep.subr.mxu0 0.0
      %1313 = vmatpush1.msra.mxu0 %v1304
      %1314 = vmatprep.subr.mxu0 0.0
      %1315 = vmatpush1.msra.mxu0 %v1305
      %1316 = vmatprep.subr.mxu0 0.0
      %1317 = vmatpush1.msra.mxu0 %v1306
      %1318 = vmatprep.subr.mxu0 0.0
      %1319 = vmatpush1.msra.mxu0 %v1307
      %1320 = vmatprep.subr.mxu0 0.0
      %1321 = vmatpush1.msra.mxu0 %v1310
      %1322 = vmatprep.subr.mxu0 0.0
      %1323 = vmatpush1.msra.mxu0 0.0
      %1324 = vmatprep.subr.mxu0 0.0
      %1325 = vmatpush1.msra.mxu0 0.0
      %1326 = vmatprep.subr.mxu0 0.0
      %1327 = vmatpush1.msra.mxu0 0.0
      %1328 = vmatprep.subr.mxu0 0.0
      %1329 = vmatpush1.msra.mxu0 0.0
      %1330 = vmatprep.subr.mxu0 0.0
      %1331 = vmatpush1.msra.mxu0 0.0
      %1332 = vmatprep.subr.mxu0 0.0
      %1333 = vmatpush1.msra.mxu0 0.0
      %1334 = vmatprep.subr.mxu0 0.0
      %1335 = vmatpush1.msra.mxu0 0.0
      %1336 = vmatprep.subr.mxu0 0.0
      %1337 = vmatpush1.msra.mxu0 0.0
      %1338 = vmatprep.subr.mxu0 0.0
      %1339 = vmatpush1.msra.mxu0 0.0
      %1340 = vmatprep.subr.mxu0 0.0
      %1341 = vmatpush1.msra.mxu0 0.0
      %1342 = vmatprep.subr.mxu0 0.0
      %1343 = vmatpush1.msra.mxu0 0.0
      %1344 = vmatprep.subr.mxu0 0.0
      %1345 = vmatpush1.msra.mxu0 0.0
      %1346 = vmatprep.subr.mxu0 0.0
      %1347 = vmatpush1.msra.mxu0 0.0
      %1348 = vmatprep.subr.mxu0 0.0
      %1349 = vmatpush1.msra.mxu0 0.0
      %1350 = vmatprep.subr.mxu0 0.0
      %1351 = vmatpush1.msra.mxu0 0.0
      %1352 = vmatprep.subr.mxu0 0.0
      %1353 = vmatpush1.msra.mxu0 0.0
      %1354 = vmatprep.subr.mxu0 0.0
      %1355 = vmatpush1.msra.mxu0 0.0
      %1356 = vmatprep.subr.mxu0 0.0
      %1357 = vmatpush1.msra.mxu0 0.0
      %1358 = vmatprep.subr.mxu0 0.0
      %1359 = vmatpush1.msra.mxu0 0.0
      %1360 = vmatprep.subr.mxu0 0.0
      %1361 = vmatpush1.msra.mxu0 0.0
      %1362 = vmatprep.subr.mxu0 0.0
      %1363 = vmatpush1.msra.mxu0 0.0
      %1364 = vmatprep.subr.mxu0 0.0
      %1365 = vmatpush1.msra.mxu0 0.0
      %1366 = vmatprep.subr.mxu0 0.0
      %1367 = vmatpush1.msra.mxu0 0.0
      %1368 = vmatprep.subr.mxu0 0.0
      %1369 = vmatpush1.msra.mxu0 0.0
      %1370 = vmatprep.subr.mxu0 0.0
      %1371 = vmatpush1.msra.mxu0 0.0
      %1372 = vmatprep.subr.mxu0 0.0
      %1373 = vmatpush1.msra.mxu0 0.0
      %1374 = vmatprep.subr.mxu0 0.0
      %1375 = vmatpush1.msra.mxu0 0.0
      %1376 = vmatprep.mubr.f32.mxu0 0.0
      %1377 = vmatmul.mubr.f32.gmra.mrb[0].mxu0 %v351
      %v1378 = vpop.f32.mrb[0].mxu0
      %v1379 = vadd.f32 %v1309, %v1378
      %v1380 = vpop.f32.mrb[0].mxu0
      %1381 = vdwg.mxu0
      %vm1382 = vcmp.ge.f32.partialorder %v1379, 0.0
      %v1383 = vmul.f32 %v1379, 0.2
      %v1384 = vsel %vm1382, %v1379, %v1383
      %s1385 = scalar_lea.vmem %s298, 80
      %v1386 = vld [vmem:[%s1385] sm:$0xff]
      %v1387 = vld [vmem:[%s1385 + $0x8] sm:$0xf]
      %1388 = vmatprep.subr.mxu0 0.0
      %1389 = vmatpush1.msra.mxu0 %v1384
      %1390 = vmatprep.subr.mxu0 0.0
      %1391 = vmatpush1.msra.mxu0 0.0
      %1392 = vmatprep.subr.mxu0 0.0
      %1393 = vmatpush1.msra.mxu0 0.0
      %1394 = vmatprep.subr.mxu0 0.0
      %1395 = vmatpush1.msra.mxu0 0.0
      %1396 = vmatprep.subr.mxu0 0.0
      %1397 = vmatpush1.msra.mxu0 0.0
      %1398 = vmatprep.subr.mxu0 0.0
      %1399 = vmatpush1.msra.mxu0 0.0
      %1400 = vmatprep.subr.mxu0 0.0
      %1401 = vmatpush1.msra.mxu0 0.0
      %1402 = vmatprep.subr.mxu0 0.0
      %1403 = vmatpush1.msra.mxu0 0.0
      %1404 = vmatprep.subr.mxu0 0.0
      %1405 = vmatpush1.msra.mxu0 0.0
      %1406 = vmatprep.subr.mxu0 0.0
      %1407 = vmatpush1.msra.mxu0 0.0
      %1408 = vmatprep.subr.mxu0 0.0
      %1409 = vmatpush1.msra.mxu0 0.0
      %1410 = vmatprep.subr.mxu0 0.0
      %1411 = vmatpush1.msra.mxu0 0.0
      %1412 = vmatprep.subr.mxu0 0.0
      %1413 = vmatpush1.msra.mxu0 0.0
      %1414 = vmatprep.subr.mxu0 0.0
      %1415 = vmatpush1.msra.mxu0 0.0
      %1416 = vmatprep.subr.mxu0 0.0
      %1417 = vmatpush1.msra.mxu0 0.0
      %1418 = vmatprep.subr.mxu0 0.0
      %1419 = vmatpush1.msra.mxu0 0.0
      %1420 = vmatprep.subr.mxu0 0.0
      %1421 = vmatpush1.msra.mxu0 0.0
      %1422 = vmatprep.subr.mxu0 0.0
      %1423 = vmatpush1.msra.mxu0 0.0
      %1424 = vmatprep.subr.mxu0 0.0
      %1425 = vmatpush1.msra.mxu0 0.0
      %1426 = vmatprep.subr.mxu0 0.0
      %1427 = vmatpush1.msra.mxu0 0.0
      %1428 = vmatprep.subr.mxu0 0.0
      %1429 = vmatpush1.msra.mxu0 0.0
      %1430 = vmatprep.subr.mxu0 0.0
      %1431 = vmatpush1.msra.mxu0 0.0
      %1432 = vmatprep.subr.mxu0 0.0
      %1433 = vmatpush1.msra.mxu0 0.0
      %1434 = vmatprep.subr.mxu0 0.0
      %1435 = vmatpush1.msra.mxu0 0.0
      %1436 = vmatprep.subr.mxu0 0.0
      %1437 = vmatpush1.msra.mxu0 0.0
      %1438 = vmatprep.subr.mxu0 0.0
      %1439 = vmatpush1.msra.mxu0 0.0
      %1440 = vmatprep.subr.mxu0 0.0
      %1441 = vmatpush1.msra.mxu0 0.0
      %1442 = vmatprep.subr.mxu0 0.0
      %1443 = vmatpush1.msra.mxu0 0.0
      %1444 = vmatprep.subr.mxu0 0.0
      %1445 = vmatpush1.msra.mxu0 0.0
      %1446 = vmatprep.subr.mxu0 0.0
      %1447 = vmatpush1.msra.mxu0 0.0
      %1448 = vmatprep.subr.mxu0 0.0
      %1449 = vmatpush1.msra.mxu0 0.0
      %1450 = vmatprep.subr.mxu0 0.0
      %1451 = vmatpush1.msra.mxu0 0.0
      %1452 = vmatprep.mubr.f32.mxu0 0.0
      %1453 = vmatmul.mubr.f32.gmra.mrb[0].mxu0 %v432
      %v1454 = vpop.f32.mrb[0].mxu0
      %v1455 = vadd.f32 %v1386, %v1454
      %v1456 = vpop.f32.mrb[0].mxu0
      %1457 = vmatprep.mubr.f32.mxu0 0.0
      %1458 = vmatmul.mubr.f32.gmra.mrb[0].mxu0 %v435
      %v1459 = vpop.f32.mrb[0].mxu0
      %v1460 = vadd.f32 %v1387, %v1459
      %v1461 = vpop.f32.mrb[0].mxu0
      %1462 = vdwg.mxu0
      %s1463 = scalar_lea.vmem %s309, 80
      %1464 = vst.msk [vmem:[%s1463] sm:$0xff] %vm512, %v1455
      %1465 = vst.msk [vmem:[%s1463 + $0x8] sm:$0xf] %vm514, %v1460
      %v1466 = vld [vmem:[%s1088] sm:$0xf]
      %v1467 = vld [vmem:[%s1278] sm:$0xf]
      %s1468 = scalar_lea.vmem %s284, 32
      %v1469 = vld [vmem:[%s1468] sm:$0xf]
      %v1471 = vrot.slane %v1466, 4
      %1472 = vrot.lane.b32.xlu0 %v1471, 127
      %v1473 = vpop.permute.xlu0 %1472
      %1475 = vrot.lane.b32.xlu0 %v1466, 126
      %v1476 = vpop.permute.xlu0 %1475
      %v1479 = vrot.slane %v1467, 4
      %1481 = vrot.lane.b32.xlu0 %v1467, 127
      %v1482 = vpop.permute.xlu0 %1481
      %1484 = vrot.lane.b32.xlu0 %v1479, 126
      %v1485 = vpop.permute.xlu0 %1484
      %v1488 = vrot.slane %v1469, 4
      %1489 = vrot.lane.b32.xlu0 %v1488, 127
      %v1490 = vpop.permute.xlu0 %1489
      %1492 = vrot.lane.b32.xlu0 %v1469, 126
      %v1493 = vpop.permute.xlu0 %1492
      %v1494 = vsel %vm343, %v1466, %v1473
      %v1495 = vsel %vm343, %v1476, %v1479
      %v1496 = vsel %vm343, %v1482, %v1485
      %v1497 = vsel %vm343, %v1469, %v1490
      %s1498 = scalar_lea.vmem %s291, 48
      %v1499 = vld [vmem:[%s1498] sm:$0xff]
      %v1500 = vsel %vm343, %v1493, 0
      %1502 = vmatprep.subr.mxu0 0.0
      %1503 = vmatpush1.msra.mxu0 %v1494
      %1504 = vmatprep.subr.mxu0 0.0
      %1505 = vmatpush1.msra.mxu0 %v1495
      %1506 = vmatprep.subr.mxu0 0.0
      %1507 = vmatpush1.msra.mxu0 %v1496
      %1508 = vmatprep.subr.mxu0 0.0
      %1509 = vmatpush1.msra.mxu0 %v1497
      %1510 = vmatprep.subr.mxu0 0.0
      %1511 = vmatpush1.msra.mxu0 %v1500
      %1512 = vmatprep.subr.mxu0 0.0
      %1513 = vmatpush1.msra.mxu0 0.0
      %1514 = vmatprep.subr.mxu0 0.0
      %1515 = vmatpush1.msra.mxu0 0.0
      %1516 = vmatprep.subr.mxu0 0.0
      %1517 = vmatpush1.msra.mxu0 0.0
      %1518 = vmatprep.subr.mxu0 0.0
      %1519 = vmatpush1.msra.mxu0 0.0
      %1520 = vmatprep.subr.mxu0 0.0
      %1521 = vmatpush1.msra.mxu0 0.0
      %1522 = vmatprep.subr.mxu0 0.0
      %1523 = vmatpush1.msra.mxu0 0.0
      %1524 = vmatprep.subr.mxu0 0.0
      %1525 = vmatpush1.msra.mxu0 0.0
      %1526 = vmatprep.subr.mxu0 0.0
      %1527 = vmatpush1.msra.mxu0 0.0
      %1528 = vmatprep.subr.mxu0 0.0
      %1529 = vmatpush1.msra.mxu0 0.0
      %1530 = vmatprep.subr.mxu0 0.0
      %1531 = vmatpush1.msra.mxu0 0.0
      %1532 = vmatprep.subr.mxu0 0.0
      %1533 = vmatpush1.msra.mxu0 0.0
      %1534 = vmatprep.subr.mxu0 0.0
      %1535 = vmatpush1.msra.mxu0 0.0
      %1536 = vmatprep.subr.mxu0 0.0
      %1537 = vmatpush1.msra.mxu0 0.0
      %1538 = vmatprep.subr.mxu0 0.0
      %1539 = vmatpush1.msra.mxu0 0.0
      %1540 = vmatprep.subr.mxu0 0.0
      %1541 = vmatpush1.msra.mxu0 0.0
      %1542 = vmatprep.subr.mxu0 0.0
      %1543 = vmatpush1.msra.mxu0 0.0
      %1544 = vmatprep.subr.mxu0 0.0
      %1545 = vmatpush1.msra.mxu0 0.0
      %1546 = vmatprep.subr.mxu0 0.0
      %1547 = vmatpush1.msra.mxu0 0.0
      %1548 = vmatprep.subr.mxu0 0.0
      %1549 = vmatpush1.msra.mxu0 0.0
      %1550 = vmatprep.subr.mxu0 0.0
      %1551 = vmatpush1.msra.mxu0 0.0
      %1552 = vmatprep.subr.mxu0 0.0
      %1553 = vmatpush1.msra.mxu0 0.0
      %1554 = vmatprep.subr.mxu0 0.0
      %1555 = vmatpush1.msra.mxu0 0.0
      %1556 = vmatprep.subr.mxu0 0.0
      %1557 = vmatpush1.msra.mxu0 0.0
      %1558 = vmatprep.subr.mxu0 0.0
      %1559 = vmatpush1.msra.mxu0 0.0
      %1560 = vmatprep.subr.mxu0 0.0
      %1561 = vmatpush1.msra.mxu0 0.0
      %1562 = vmatprep.subr.mxu0 0.0
      %1563 = vmatpush1.msra.mxu0 0.0
      %1564 = vmatprep.subr.mxu0 0.0
      %1565 = vmatpush1.msra.mxu0 0.0
      %1566 = vmatprep.mubr.f32.mxu0 0.0
      %1567 = vmatmul.mubr.f32.gmra.mrb[0].mxu0 %v351
      %v1568 = vpop.f32.mrb[0].mxu0
      %v1569 = vadd.f32 %v1499, %v1568
      %v1570 = vpop.f32.mrb[0].mxu0
      %1571 = vdwg.mxu0
      %vm1572 = vcmp.ge.f32.partialorder %v1569, 0.0
      %v1573 = vmul.f32 %v1569, 0.2
      %v1574 = vsel %vm1572, %v1569, %v1573
      %s1575 = scalar_lea.vmem %s298, 96
      %v1576 = vld [vmem:[%s1575] sm:$0xff]
      %v1577 = vld [vmem:[%s1575 + $0x8] sm:$0xf]
      %1578 = vmatprep.subr.mxu0 0.0
      %1579 = vmatpush1.msra.mxu0 %v1574
      %1580 = vmatprep.subr.mxu0 0.0
      %1581 = vmatpush1.msra.mxu0 0.0
      %1582 = vmatprep.subr.mxu0 0.0
      %1583 = vmatpush1.msra.mxu0 0.0
      %1584 = vmatprep.subr.mxu0 0.0
      %1585 = vmatpush1.msra.mxu0 0.0
      %1586 = vmatprep.subr.mxu0 0.0
      %1587 = vmatpush1.msra.mxu0 0.0
      %1588 = vmatprep.subr.mxu0 0.0
      %1589 = vmatpush1.msra.mxu0 0.0
      %1590 = vmatprep.subr.mxu0 0.0
      %1591 = vmatpush1.msra.mxu0 0.0
      %1592 = vmatprep.subr.mxu0 0.0
      %1593 = vmatpush1.msra.mxu0 0.0
      %1594 = vmatprep.subr.mxu0 0.0
      %1595 = vmatpush1.msra.mxu0 0.0
      %1596 = vmatprep.subr.mxu0 0.0
      %1597 = vmatpush1.msra.mxu0 0.0
      %1598 = vmatprep.subr.mxu0 0.0
      %1599 = vmatpush1.msra.mxu0 0.0
      %1600 = vmatprep.subr.mxu0 0.0
      %1601 = vmatpush1.msra.mxu0 0.0
      %1602 = vmatprep.subr.mxu0 0.0
      %1603 = vmatpush1.msra.mxu0 0.0
      %1604 = vmatprep.subr.mxu0 0.0
      %1605 = vmatpush1.msra.mxu0 0.0
      %1606 = vmatprep.subr.mxu0 0.0
      %1607 = vmatpush1.msra.mxu0 0.0
      %1608 = vmatprep.subr.mxu0 0.0
      %1609 = vmatpush1.msra.mxu0 0.0
      %1610 = vmatprep.subr.mxu0 0.0
      %1611 = vmatpush1.msra.mxu0 0.0
      %1612 = vmatprep.subr.mxu0 0.0
      %1613 = vmatpush1.msra.mxu0 0.0
      %1614 = vmatprep.subr.mxu0 0.0
      %1615 = vmatpush1.msra.mxu0 0.0
      %1616 = vmatprep.subr.mxu0 0.0
      %1617 = vmatpush1.msra.mxu0 0.0
      %1618 = vmatprep.subr.mxu0 0.0
      %1619 = vmatpush1.msra.mxu0 0.0
      %1620 = vmatprep.subr.mxu0 0.0
      %1621 = vmatpush1.msra.mxu0 0.0
      %1622 = vmatprep.subr.mxu0 0.0
      %1623 = vmatpush1.msra.mxu0 0.0
      %1624 = vmatprep.subr.mxu0 0.0
      %1625 = vmatpush1.msra.mxu0 0.0
      %1626 = vmatprep.subr.mxu0 0.0
      %1627 = vmatpush1.msra.mxu0 0.0
      %1628 = vmatprep.subr.mxu0 0.0
      %1629 = vmatpush1.msra.mxu0 0.0
      %1630 = vmatprep.subr.mxu0 0.0
      %1631 = vmatpush1.msra.mxu0 0.0
      %1632 = vmatprep.subr.mxu0 0.0
      %1633 = vmatpush1.msra.mxu0 0.0
      %1634 = vmatprep.subr.mxu0 0.0
      %1635 = vmatpush1.msra.mxu0 0.0
      %1636 = vmatprep.subr.mxu0 0.0
      %1637 = vmatpush1.msra.mxu0 0.0
      %1638 = vmatprep.subr.mxu0 0.0
      %1639 = vmatpush1.msra.mxu0 0.0
      %1640 = vmatprep.subr.mxu0 0.0
      %1641 = vmatpush1.msra.mxu0 0.0
      %1642 = vmatprep.mubr.f32.mxu0 0.0
      %1643 = vmatmul.mubr.f32.gmra.mrb[0].mxu0 %v432
      %v1644 = vpop.f32.mrb[0].mxu0
      %v1645 = vadd.f32 %v1576, %v1644
      %v1646 = vpop.f32.mrb[0].mxu0
      %1647 = vmatprep.mubr.f32.mxu0 0.0
      %1648 = vmatmul.mubr.f32.gmra.mrb[0].mxu0 %v435
      %v1649 = vpop.f32.mrb[0].mxu0
      %v1650 = vadd.f32 %v1577, %v1649
      %v1651 = vpop.f32.mrb[0].mxu0
      %1652 = vdwg.mxu0
      %s1653 = scalar_lea.vmem %s309, 96
      %1654 = vst.msk [vmem:[%s1653] sm:$0xff] %vm512, %v1645
      %1655 = vst.msk [vmem:[%s1653 + $0x8] sm:$0xf] %vm514, %v1650
      %v1656 = vld [vmem:[%s1278] sm:$0xf]
      %v1657 = vld [vmem:[%s1468] sm:$0xf]
      %s1658 = scalar_lea.vmem %s284, 36
      %v1659 = vld [vmem:[%s1658] sm:$0xf]
      %v1661 = vrot.slane %v1656, 4
      %1662 = vrot.lane.b32.xlu0 %v1661, 127
      %v1663 = vpop.permute.xlu0 %1662
      %1665 = vrot.lane.b32.xlu0 %v1656, 126
      %v1666 = vpop.permute.xlu0 %1665
      %v1669 = vrot.slane %v1657, 4
      %1671 = vrot.lane.b32.xlu0 %v1657, 127
      %v1672 = vpop.permute.xlu0 %1671
      %1674 = vrot.lane.b32.xlu0 %v1669, 126
      %v1675 = vpop.permute.xlu0 %1674
      %v1678 = vrot.slane %v1659, 4
      %1679 = vrot.lane.b32.xlu0 %v1678, 127
      %v1680 = vpop.permute.xlu0 %1679
      %1682 = vrot.lane.b32.xlu0 %v1659, 126
      %v1683 = vpop.permute.xlu0 %1682
      %v1684 = vsel %vm343, %v1656, %v1663
      %v1685 = vsel %vm343, %v1666, %v1669
      %v1686 = vsel %vm343, %v1672, %v1675
      %v1687 = vsel %vm343, %v1659, %v1680
      %s1688 = scalar_lea.vmem %s291, 56
      %v1689 = vld [vmem:[%s1688] sm:$0xff]
      %v1690 = vsel %vm343, %v1683, 0
      %1692 = vmatprep.subr.mxu0 0.0
      %1693 = vmatpush1.msra.mxu0 %v1684
      %1694 = vmatprep.subr.mxu0 0.0
      %1695 = vmatpush1.msra.mxu0 %v1685
      %1696 = vmatprep.subr.mxu0 0.0
      %1697 = vmatpush1.msra.mxu0 %v1686
      %1698 = vmatprep.subr.mxu0 0.0
      %1699 = vmatpush1.msra.mxu0 %v1687
      %1700 = vmatprep.subr.mxu0 0.0
      %1701 = vmatpush1.msra.mxu0 %v1690
      %1702 = vmatprep.subr.mxu0 0.0
      %1703 = vmatpush1.msra.mxu0 0.0
      %1704 = vmatprep.subr.mxu0 0.0
      %1705 = vmatpush1.msra.mxu0 0.0
      %1706 = vmatprep.subr.mxu0 0.0
      %1707 = vmatpush1.msra.mxu0 0.0
      %1708 = vmatprep.subr.mxu0 0.0
      %1709 = vmatpush1.msra.mxu0 0.0
      %1710 = vmatprep.subr.mxu0 0.0
      %1711 = vmatpush1.msra.mxu0 0.0
      %1712 = vmatprep.subr.mxu0 0.0
      %1713 = vmatpush1.msra.mxu0 0.0
      %1714 = vmatprep.subr.mxu0 0.0
      %1715 = vmatpush1.msra.mxu0 0.0
      %1716 = vmatprep.subr.mxu0 0.0
      %1717 = vmatpush1.msra.mxu0 0.0
      %1718 = vmatprep.subr.mxu0 0.0
      %1719 = vmatpush1.msra.mxu0 0.0
      %1720 = vmatprep.subr.mxu0 0.0
      %1721 = vmatpush1.msra.mxu0 0.0
      %1722 = vmatprep.subr.mxu0 0.0
      %1723 = vmatpush1.msra.mxu0 0.0
      %1724 = vmatprep.subr.mxu0 0.0
      %1725 = vmatpush1.msra.mxu0 0.0
      %1726 = vmatprep.subr.mxu0 0.0
      %1727 = vmatpush1.msra.mxu0 0.0
      %1728 = vmatprep.subr.mxu0 0.0
      %1729 = vmatpush1.msra.mxu0 0.0
      %1730 = vmatprep.subr.mxu0 0.0
      %1731 = vmatpush1.msra.mxu0 0.0
      %1732 = vmatprep.subr.mxu0 0.0
      %1733 = vmatpush1.msra.mxu0 0.0
      %1734 = vmatprep.subr.mxu0 0.0
      %1735 = vmatpush1.msra.mxu0 0.0
      %1736 = vmatprep.subr.mxu0 0.0
      %1737 = vmatpush1.msra.mxu0 0.0
      %1738 = vmatprep.subr.mxu0 0.0
      %1739 = vmatpush1.msra.mxu0 0.0
      %1740 = vmatprep.subr.mxu0 0.0
      %1741 = vmatpush1.msra.mxu0 0.0
      %1742 = vmatprep.subr.mxu0 0.0
      %1743 = vmatpush1.msra.mxu0 0.0
      %1744 = vmatprep.subr.mxu0 0.0
      %1745 = vmatpush1.msra.mxu0 0.0
      %1746 = vmatprep.subr.mxu0 0.0
      %1747 = vmatpush1.msra.mxu0 0.0
      %1748 = vmatprep.subr.mxu0 0.0
      %1749 = vmatpush1.msra.mxu0 0.0
      %1750 = vmatprep.subr.mxu0 0.0
      %1751 = vmatpush1.msra.mxu0 0.0
      %1752 = vmatprep.subr.mxu0 0.0
      %1753 = vmatpush1.msra.mxu0 0.0
      %1754 = vmatprep.subr.mxu0 0.0
      %1755 = vmatpush1.msra.mxu0 0.0
      %1756 = vmatprep.mubr.f32.mxu0 0.0
      %1757 = vmatmul.mubr.f32.gmra.mrb[0].mxu0 %v351
      %v1758 = vpop.f32.mrb[0].mxu0
      %v1759 = vadd.f32 %v1689, %v1758
      %v1760 = vpop.f32.mrb[0].mxu0
      %1761 = vdwg.mxu0
      %vm1762 = vcmp.ge.f32.partialorder %v1759, 0.0
      %v1763 = vmul.f32 %v1759, 0.2
      %v1764 = vsel %vm1762, %v1759, %v1763
      %s1765 = scalar_lea.vmem %s298, 112
      %v1766 = vld [vmem:[%s1765] sm:$0xff]
      %v1767 = vld [vmem:[%s1765 + $0x8] sm:$0xf]
      %1768 = vmatprep.subr.mxu0 0.0
      %1769 = vmatpush1.msra.mxu0 %v1764
      %1770 = vmatprep.subr.mxu0 0.0
      %1771 = vmatpush1.msra.mxu0 0.0
      %1772 = vmatprep.subr.mxu0 0.0
      %1773 = vmatpush1.msra.mxu0 0.0
      %1774 = vmatprep.subr.mxu0 0.0
      %1775 = vmatpush1.msra.mxu0 0.0
      %1776 = vmatprep.subr.mxu0 0.0
      %1777 = vmatpush1.msra.mxu0 0.0
      %1778 = vmatprep.subr.mxu0 0.0
      %1779 = vmatpush1.msra.mxu0 0.0
      %1780 = vmatprep.subr.mxu0 0.0
      %1781 = vmatpush1.msra.mxu0 0.0
      %1782 = vmatprep.subr.mxu0 0.0
      %1783 = vmatpush1.msra.mxu0 0.0
      %1784 = vmatprep.subr.mxu0 0.0
      %1785 = vmatpush1.msra.mxu0 0.0
      %1786 = vmatprep.subr.mxu0 0.0
      %1787 = vmatpush1.msra.mxu0 0.0
      %1788 = vmatprep.subr.mxu0 0.0
      %1789 = vmatpush1.msra.mxu0 0.0
      %1790 = vmatprep.subr.mxu0 0.0
      %1791 = vmatpush1.msra.mxu0 0.0
      %1792 = vmatprep.subr.mxu0 0.0
      %1793 = vmatpush1.msra.mxu0 0.0
      %1794 = vmatprep.subr.mxu0 0.0
      %1795 = vmatpush1.msra.mxu0 0.0
      %1796 = vmatprep.subr.mxu0 0.0
      %1797 = vmatpush1.msra.mxu0 0.0
      %1798 = vmatprep.subr.mxu0 0.0
      %1799 = vmatpush1.msra.mxu0 0.0
      %1800 = vmatprep.subr.mxu0 0.0
      %1801 = vmatpush1.msra.mxu0 0.0
      %1802 = vmatprep.subr.mxu0 0.0
      %1803 = vmatpush1.msra.mxu0 0.0
      %1804 = vmatprep.subr.mxu0 0.0
      %1805 = vmatpush1.msra.mxu0 0.0
      %1806 = vmatprep.subr.mxu0 0.0
      %1807 = vmatpush1.msra.mxu0 0.0
      %1808 = vmatprep.subr.mxu0 0.0
      %1809 = vmatpush1.msra.mxu0 0.0
      %1810 = vmatprep.subr.mxu0 0.0
      %1811 = vmatpush1.msra.mxu0 0.0
      %1812 = vmatprep.subr.mxu0 0.0
      %1813 = vmatpush1.msra.mxu0 0.0
      %1814 = vmatprep.subr.mxu0 0.0
      %1815 = vmatpush1.msra.mxu0 0.0
      %1816 = vmatprep.subr.mxu0 0.0
      %1817 = vmatpush1.msra.mxu0 0.0
      %1818 = vmatprep.subr.mxu0 0.0
      %1819 = vmatpush1.msra.mxu0 0.0
      %1820 = vmatprep.subr.mxu0 0.0
      %1821 = vmatpush1.msra.mxu0 0.0
      %1822 = vmatprep.subr.mxu0 0.0
      %1823 = vmatpush1.msra.mxu0 0.0
      %1824 = vmatprep.subr.mxu0 0.0
      %1825 = vmatpush1.msra.mxu0 0.0
      %1826 = vmatprep.subr.mxu0 0.0
      %1827 = vmatpush1.msra.mxu0 0.0
      %1828 = vmatprep.subr.mxu0 0.0
      %1829 = vmatpush1.msra.mxu0 0.0
      %1830 = vmatprep.subr.mxu0 0.0
      %1831 = vmatpush1.msra.mxu0 0.0
      %1832 = vmatprep.mubr.f32.mxu0 0.0
      %1833 = vmatmul.mubr.f32.gmra.mrb[0].mxu0 %v432
      %v1834 = vpop.f32.mrb[0].mxu0
      %v1835 = vadd.f32 %v1766, %v1834
      %v1836 = vpop.f32.mrb[0].mxu0
      %1837 = vmatprep.mubr.f32.mxu0 0.0
      %1838 = vmatmul.mubr.f32.gmra.mrb[0].mxu0 %v435
      %v1839 = vpop.f32.mrb[0].mxu0
      %v1840 = vadd.f32 %v1767, %v1839
      %v1841 = vpop.f32.mrb[0].mxu0
      %1842 = vdwg.mxu0
      %s1843 = scalar_lea.vmem %s309, 112
      %1844 = vst.msk [vmem:[%s1843] sm:$0xff] %vm512, %v1835
      %1845 = vst.msk [vmem:[%s1843 + $0x8] sm:$0xf] %vm514, %v1840
      %s1846 = smul.u32 8, %s20
      %p1847 = scmp.lt.s32.totalorder %s21, 1
      %s1848 = scalar_select %p1847, %s21, 1
      %p1849 = scmp.lt.s32.totalorder %s1846, 15
      %s1850 = scalar_select %p1849, %s1846, 15
      %s1851 = smul.addr %s1850, 2
      %s1852 = smul.addr %s1848, 32
      %s1853 = sadd.s32 %s1851, %s1852
      %s1854 = smul.addr %s1853, 8
      %s1855 = scalar_lea.vmem %s5, %s1854
      // Predicated region
      $region41: #{tpu_custom_call.1} parent=39 // pred_check
        %p1856 = pneg %p172
      $region42: #{tpu_custom_call.1} parent=39 // pred_check_branch
        %1858 = sbr.rel (%p1856) target = $region44
      $region43: #{tpu_custom_call.1} parent=39 // pred_region
        %s1859 = smul.u32 8, %s20
      $region44: #{tpu_custom_call.1} parent=39 // pred_fallthru
        _
    $region40: #{tpu_custom_call.1} parent=5 // pred_fallthru
      _
    %p1860 = scmp.le.s32.totalorder 2, %s11
    // Predicated region
    $region45: #{tpu_custom_call.1} parent=5 // pred_check
      %p1861 = pneg %p1860
    $region46: #{tpu_custom_call.1} parent=5 // pred_check_branch
      %1863 = sbr.rel (%p1861) target = $region48
    $region47: #{tpu_custom_call.1} parent=5 // pred_region
      %s1864 = ssub.s32 %s11, 2
      // Predicated region
      $region49: #{tpu_custom_call.1} parent=47 // pred_check
        %p1865 = pneg %p178
      $region50: #{tpu_custom_call.1} parent=47 // pred_check_branch
        %1867 = sbr.rel (%p1865) target = $region52
      $region51: #{tpu_custom_call.1} parent=47 // pred_region
        %s1868 = smul.u32 8, %s22
        %p1869 = scmp.lt.s32.totalorder %s23, 1
        %s1870 = scalar_select %p1869, %s23, 1
        %p1871 = scmp.lt.s32.totalorder %s1868, 15
        %s1872 = scalar_select %p1871, %s1868, 15
        %s1873 = smul.addr %s1872, 2
        %s1874 = smul.addr %s1870, 32
        %s1875 = sadd.s32 %s1873, %s1874
        %s1876 = smul.addr %s1875, 8
        %s1877 = scalar_lea.vmem %s5, %s1876
      $region52: #{tpu_custom_call.1} parent=47 // pred_fallthru
        _
    $region48: #{tpu_custom_call.1} parent=5 // pred_fallthru
      _
  $region6: #{tpu_custom_call.1} parent=0 // loop_footer
    %s15 = sadd.s32 1, %s11
  $region7: #{tpu_custom_call.1} parent=0 // loop_footer_branch
    %10 = sbr.rel target = $region3
  $region8: #{tpu_custom_call.1} parent=0 // loop_exit
    _

</llo_original>
